<compile_context>
chip_gen: v7x
topology: tpu7x:2x2x1
jax: 0.10.0
libtpu: 0.0.40
codegen_flags: <defaults>
</compile_context>

<pallas_src>
import jax
import jax.numpy as jnp
import numpy as np
from jax.experimental import pallas as pl
from jax.experimental.pallas import tpu as pltpu


def _softplus_beta100(x):
    # torch.nn.Softplus(beta=100, threshold=20):
    #   if beta*x > 20 -> x ; else log1p(exp(beta*x)) / beta
    bx = 100.0 * x
    soft = jnp.log1p(jnp.exp(jnp.minimum(bx, 20.0))) * np.float32(0.01)
    return jnp.where(bx > 20.0, x, soft)


def _make_kernel(num_lin, num_w, skip_in, d_out):
    """Pallas kernel body for a fixed (static) layer structure.

    Activations are (C, tile_n): channels on sublanes, batch on lanes.
    Skip layers consume two weight refs (x-slice and inputs-slice, already
    scaled by 1/sqrt(2) in the wrapper).
    """

    def kernel(*refs):
        x_ref = refs[0]
        w_refs = refs[1:1 + num_w]
        b_refs = refs[1 + num_w:1 + num_w + num_lin]
        o_ref = refs[1 + num_w + num_lin]

        inputs = x_ref[...]                      # (d_in, tile_n)
        x = inputs
        wi = 0
        for l in range(num_lin):
            b = b_refs[l][...]                   # (out, 1) -> lane broadcast
            if l in skip_in:
                w_a = w_refs[wi][...]            # (out, h - d_in)
                w_b = w_refs[wi + 1][...]        # (out, d_in)
                wi += 2
                x = (jnp.dot(w_a, x, preferred_element_type=jnp.float32)
                     + jnp.dot(w_b, inputs, preferred_element_type=jnp.float32)
                     + b)
            else:
                w = w_refs[wi][...]              # (out, in)
                wi += 1
                x = jnp.dot(w, x, preferred_element_type=jnp.float32) + b
            if l < num_lin - 1:
                x = _softplus_beta100(x)
        if d_out == 3:
            x = jax.nn.sigmoid(x)
        o_ref[...] = x.astype(o_ref.dtype)

    return kernel


def init_params(key, d_in, d_out, d_hidden, n_layers, skip_in, bias=0.5,
                inside_outside=False):
    """Geometric init matching SdfDecoderYh.__init__ (PyTorch (out,in) layout)."""
    dims = [d_in] + [d_hidden] * n_layers + [d_out]
    num_layers = len(dims)
    weights, biases = [], []
    for l in range(num_layers - 1):
        out_dim = dims[l + 1] - dims[0] if (l + 1) in skip_in else dims[l + 1]
        in_dim = dims[l]
        key, wk = jax.random.split(key)
        if l == num_layers - 2:
            mean = np.sqrt(np.pi) / np.sqrt(in_dim)
            if inside_outside:
                mean = -mean
            w = mean + 1e-4 * jax.random.normal(wk, (out_dim, in_dim), jnp.float32)
            b_val = bias if inside_outside else -bias
            b = jnp.full((out_dim,), b_val, jnp.float32)
        else:
            std = np.sqrt(2.0) / np.sqrt(out_dim)
            w = std * jax.random.normal(wk, (out_dim, in_dim), jnp.float32)
            b = jnp.zeros((out_dim,), jnp.float32)
        weights.append(w)
        biases.append(b)
    return weights, biases


def _prepare_params(weights, biases, skip_in, d_in):
    """Split skip-layer weights (fold in 1/sqrt(2)) and reshape biases to (out,1)."""
    inv_sqrt2 = np.float32(1.0 / np.sqrt(2.0))
    flat_w, flat_b = [], []
    for l, (w, b) in enumerate(zip(weights, biases)):
        if l in skip_in:
            split = w.shape[1] - d_in
            flat_w.append(w[:, :split] * inv_sqrt2)   # multiplies current x
            flat_w.append(w[:, split:] * inv_sqrt2)   # multiplies raw inputs
        else:
            flat_w.append(w)
        flat_b.append(b.reshape(-1, 1))
    return flat_w, flat_b


def sdf_decoder_yh(x, weights, biases, skip_in, d_out, *, tile_n=4096):
    """Forward pass. x: (N, d_in) f32; weights[l]: (out, in); biases[l]: (out,)."""
    N, d_in = x.shape
    skip_in = tuple(skip_in)
    num_lin = len(weights)

    # Lane tile along the batch axis: multiple of 128, not absurdly > N.
    tile_n = max(128, min(int(tile_n), ((N + 127) // 128) * 128))
    grid = (pl.cdiv(N, tile_n),)

    flat_w, flat_b = _prepare_params(weights, biases, skip_in, d_in)
    xt = x.T                                      # (d_in, N): batch on lanes

    in_specs = [pl.BlockSpec((d_in, tile_n), lambda i: (0, i))]
    for w in flat_w:
        in_specs.append(pl.BlockSpec(tuple(w.shape), lambda i: (0, 0)))
    for b in flat_b:
        in_specs.append(pl.BlockSpec(tuple(b.shape), lambda i: (0, 0)))
    out_spec = pl.BlockSpec((d_out, tile_n), lambda i: (0, i))

    kernel = _make_kernel(num_lin, len(flat_w), skip_in, d_out)

    # Advisory cost hint for the XLA scheduler.
    flops = 2 * N * sum(int(np.prod(w.shape)) for w in flat_w)
    transcendentals = 2 * N * sum(int(b.shape[0]) for b in flat_b[:-1])
    bytes_accessed = 4 * (int(x.size) + int(N) * int(d_out)
                          + sum(int(np.prod(w.shape)) for w in flat_w)
                          + sum(int(np.prod(b.shape)) for b in flat_b))

    out_t = pl.pallas_call(
        kernel,
        out_shape=jax.ShapeDtypeStruct((d_out, N), x.dtype),
        grid_spec=pltpu.PrefetchScalarGridSpec(
            num_scalar_prefetch=0,
            grid=grid,
            in_specs=in_specs,
            out_specs=out_spec,
        ),
        compiler_params=pltpu.CompilerParams(
            dimension_semantics=("parallel",)),
        cost_estimate=pl.CostEstimate(
            flops=flops,
            transcendentals=transcendentals,
            bytes_accessed=bytes_accessed),
    )(xt, *flat_w, *flat_b)

    return out_t.T                                 # (N, d_out)


def reference(x, weights, biases, skip_in, d_out):
    """Pure-JAX reference of the PyTorch forward (original (N, C) layout)."""
    inputs = x
    num_lin = len(weights)
    for l in range(num_lin):
        if l in skip_in:
            x = jnp.concatenate([x, inputs], axis=1) / np.sqrt(2.0)
        x = x @ weights[l].T + biases[l]
        if l < num_lin - 1:
            x = _softplus_beta100(x)
    if d_out == 3:
        x = jax.nn.sigmoid(x)
    return x


if __name__ == "__main__":
    # Small but representative SDF decoder:
    #   d_in=3 (xyz), d_hidden=32, n_layers=4 -> 5 linear layers, skip at l=2.
    d_in, d_out, d_hidden, n_layers = 3, 1, 32, 4
    skip_in = [2]
    N = 512

    key = jax.random.PRNGKey(0)
    key, xk = jax.random.split(key)
    x = jax.random.normal(xk, (N, d_in), jnp.float32)
    weights, biases = init_params(key, d_in, d_out, d_hidden, n_layers, skip_in)

    # tile_n=256 keeps the demo small while exercising a multi-step grid;
    # real workloads should use the large default tile.
    out = sdf_decoder_yh(x, weights, biases, skip_in, d_out, tile_n=256)
    out = jax.block_until_ready(out)

    ref = reference(x, weights, biases, skip_in, d_out)
    assert out.shape == (N, d_out)
    np.testing.assert_allclose(np.asarray(out), np.asarray(ref),
                               rtol=1e-4, atol=1e-5)
    print("KERNEL_OK")
</pallas_src>

<mosaic_0001>
module attributes {stable_mosaic.version = 11 : i64} {
  func.func @kernel(%arg0: i32, %arg1: memref<3x256xf32, #tpu.memory_space<vmem>>, %arg2: memref<32x3xf32, #tpu.memory_space<vmem>>, %arg3: memref<29x32xf32, #tpu.memory_space<vmem>>, %arg4: memref<32x29xf32, #tpu.memory_space<vmem>>, %arg5: memref<32x3xf32, #tpu.memory_space<vmem>>, %arg6: memref<32x32xf32, #tpu.memory_space<vmem>>, %arg7: memref<1x32xf32, #tpu.memory_space<vmem>>, %arg8: memref<32x1xf32, #tpu.memory_space<vmem>>, %arg9: memref<29x1xf32, #tpu.memory_space<vmem>>, %arg10: memref<32x1xf32, #tpu.memory_space<vmem>>, %arg11: memref<32x1xf32, #tpu.memory_space<vmem>>, %arg12: memref<1x1xf32, #tpu.memory_space<vmem>>, %arg13: memref<1x256xf32, #tpu.memory_space<vmem>>) attributes {dimension_semantics = [#tpu.dimension_semantics<parallel>], iteration_bounds = array<i64: 2>, scalar_prefetch = 0 : i64, scratch_operands = 0 : i64, tpu.core_type = #tpu.core_type<tc>, window_params = [{transform_indices = @transform_0, window_bounds = array<i64: 3, 256>}, {pipeline_mode = #tpu.pipeline_mode<synchronous>, transform_indices = @transform_1, window_bounds = array<i64: 32, 3>}, {pipeline_mode = #tpu.pipeline_mode<synchronous>, transform_indices = @transform_2, window_bounds = array<i64: 29, 32>}, {pipeline_mode = #tpu.pipeline_mode<synchronous>, transform_indices = @transform_3, window_bounds = array<i64: 32, 29>}, {pipeline_mode = #tpu.pipeline_mode<synchronous>, transform_indices = @transform_4, window_bounds = array<i64: 32, 3>}, {pipeline_mode = #tpu.pipeline_mode<synchronous>, transform_indices = @transform_5, window_bounds = array<i64: 32, 32>}, {pipeline_mode = #tpu.pipeline_mode<synchronous>, transform_indices = @transform_6, window_bounds = array<i64: 1, 32>}, {pipeline_mode = #tpu.pipeline_mode<synchronous>, transform_indices = @transform_7, window_bounds = array<i64: 32, 1>}, {pipeline_mode = #tpu.pipeline_mode<synchronous>, transform_indices = @transform_8, window_bounds = array<i64: 29, 1>}, {pipeline_mode = #tpu.pipeline_mode<synchronous>, transform_indices = @transform_9, window_bounds = array<i64: 32, 1>}, {pipeline_mode = #tpu.pipeline_mode<synchronous>, transform_indices = @transform_10, window_bounds = array<i64: 32, 1>}, {pipeline_mode = #tpu.pipeline_mode<synchronous>, transform_indices = @transform_11, window_bounds = array<i64: 1, 1>}, {transform_indices = @transform_12, window_bounds = array<i64: 1, 256>}]} {
    %c0 = arith.constant 0 : index
    %c0_0 = arith.constant 0 : index
    %0 = vector.load %arg1[%c0, %c0_0] : memref<3x256xf32, #tpu.memory_space<vmem>>, vector<3x256xf32>
    %c0_1 = arith.constant 0 : index
    %c0_2 = arith.constant 0 : index
    %1 = vector.load %arg8[%c0_1, %c0_2] : memref<32x1xf32, #tpu.memory_space<vmem>>, vector<32x1xf32>
    %c0_3 = arith.constant 0 : index
    %c0_4 = arith.constant 0 : index
    %2 = vector.load %arg2[%c0_3, %c0_4] : memref<32x3xf32, #tpu.memory_space<vmem>>, vector<32x3xf32>
    %cst = arith.constant dense<0.000000e+00> : vector<32x256xf32>
    %3 = tpu.matmul %2, %0, %cst {dimension_numbers = #tpu.dot_dimension_numbers<[1], [0], [0], [1], [0, 0, 1, 1], [], []>} : vector<32x3xf32>, vector<3x256xf32>, vector<32x256xf32> -> vector<32x256xf32>
    %4 = vector.broadcast %1 : vector<32x1xf32> to vector<32x256xf32>
    %5 = arith.addf %3, %4 : vector<32x256xf32>
    %cst_5 = arith.constant 1.000000e+02 : f32
    %6 = vector.broadcast %cst_5 : f32 to vector<32x256xf32>
    %7 = arith.mulf %6, %5 : vector<32x256xf32>
    %cst_6 = arith.constant 2.000000e+01 : f32
    %8 = vector.broadcast %cst_6 : f32 to vector<32x256xf32>
    %9 = arith.minimumf %7, %8 : vector<32x256xf32>
    %10 = math.exp %9 : vector<32x256xf32>
    %11 = math.log1p %10 : vector<32x256xf32>
    %cst_7 = arith.constant 0.00999999977 : f32
    %12 = vector.broadcast %cst_7 : f32 to vector<32x256xf32>
    %13 = arith.mulf %11, %12 : vector<32x256xf32>
    %cst_8 = arith.constant 2.000000e+01 : f32
    %14 = vector.broadcast %cst_8 : f32 to vector<32x256xf32>
    %15 = arith.cmpf ogt, %7, %14 : vector<32x256xf32>
    %16 = arith.select %15, %5, %13 : vector<32x256xi1>, vector<32x256xf32>
    %c0_9 = arith.constant 0 : index
    %c0_10 = arith.constant 0 : index
    %17 = vector.load %arg9[%c0_9, %c0_10] : memref<29x1xf32, #tpu.memory_space<vmem>>, vector<29x1xf32>
    %c0_11 = arith.constant 0 : index
    %c0_12 = arith.constant 0 : index
    %18 = vector.load %arg3[%c0_11, %c0_12] : memref<29x32xf32, #tpu.memory_space<vmem>>, vector<29x32xf32>
    %cst_13 = arith.constant dense<0.000000e+00> : vector<29x256xf32>
    %19 = tpu.matmul %18, %16, %cst_13 {dimension_numbers = #tpu.dot_dimension_numbers<[1], [0], [0], [1], [0, 0, 1, 1], [], []>} : vector<29x32xf32>, vector<32x256xf32>, vector<29x256xf32> -> vector<29x256xf32>
    %20 = vector.broadcast %17 : vector<29x1xf32> to vector<29x256xf32>
    %21 = arith.addf %19, %20 : vector<29x256xf32>
    %cst_14 = arith.constant 1.000000e+02 : f32
    %22 = vector.broadcast %cst_14 : f32 to vector<29x256xf32>
    %23 = arith.mulf %22, %21 : vector<29x256xf32>
    %cst_15 = arith.constant 2.000000e+01 : f32
    %24 = vector.broadcast %cst_15 : f32 to vector<29x256xf32>
    %25 = arith.minimumf %23, %24 : vector<29x256xf32>
    %26 = math.exp %25 : vector<29x256xf32>
    %27 = math.log1p %26 : vector<29x256xf32>
    %cst_16 = arith.constant 0.00999999977 : f32
    %28 = vector.broadcast %cst_16 : f32 to vector<29x256xf32>
    %29 = arith.mulf %27, %28 : vector<29x256xf32>
    %cst_17 = arith.constant 2.000000e+01 : f32
    %30 = vector.broadcast %cst_17 : f32 to vector<29x256xf32>
    %31 = arith.cmpf ogt, %23, %30 : vector<29x256xf32>
    %32 = arith.select %31, %21, %29 : vector<29x256xi1>, vector<29x256xf32>
    %c0_18 = arith.constant 0 : index
    %c0_19 = arith.constant 0 : index
    %33 = vector.load %arg10[%c0_18, %c0_19] : memref<32x1xf32, #tpu.memory_space<vmem>>, vector<32x1xf32>
    %c0_20 = arith.constant 0 : index
    %c0_21 = arith.constant 0 : index
    %34 = vector.load %arg4[%c0_20, %c0_21] : memref<32x29xf32, #tpu.memory_space<vmem>>, vector<32x29xf32>
    %c0_22 = arith.constant 0 : index
    %c0_23 = arith.constant 0 : index
    %35 = vector.load %arg5[%c0_22, %c0_23] : memref<32x3xf32, #tpu.memory_space<vmem>>, vector<32x3xf32>
    %cst_24 = arith.constant dense<0.000000e+00> : vector<32x256xf32>
    %36 = tpu.matmul %34, %32, %cst_24 {dimension_numbers = #tpu.dot_dimension_numbers<[1], [0], [0], [1], [0, 0, 1, 1], [], []>} : vector<32x29xf32>, vector<29x256xf32>, vector<32x256xf32> -> vector<32x256xf32>
    %cst_25 = arith.constant dense<0.000000e+00> : vector<32x256xf32>
    %37 = tpu.matmul %35, %0, %cst_25 {dimension_numbers = #tpu.dot_dimension_numbers<[1], [0], [0], [1], [0, 0, 1, 1], [], []>} : vector<32x3xf32>, vector<3x256xf32>, vector<32x256xf32> -> vector<32x256xf32>
    %38 = arith.addf %36, %37 : vector<32x256xf32>
    %39 = vector.broadcast %33 : vector<32x1xf32> to vector<32x256xf32>
    %40 = arith.addf %38, %39 : vector<32x256xf32>
    %cst_26 = arith.constant 1.000000e+02 : f32
    %41 = vector.broadcast %cst_26 : f32 to vector<32x256xf32>
    %42 = arith.mulf %41, %40 : vector<32x256xf32>
    %cst_27 = arith.constant 2.000000e+01 : f32
    %43 = vector.broadcast %cst_27 : f32 to vector<32x256xf32>
    %44 = arith.minimumf %42, %43 : vector<32x256xf32>
    %45 = math.exp %44 : vector<32x256xf32>
    %46 = math.log1p %45 : vector<32x256xf32>
    %cst_28 = arith.constant 0.00999999977 : f32
    %47 = vector.broadcast %cst_28 : f32 to vector<32x256xf32>
    %48 = arith.mulf %46, %47 : vector<32x256xf32>
    %cst_29 = arith.constant 2.000000e+01 : f32
    %49 = vector.broadcast %cst_29 : f32 to vector<32x256xf32>
    %50 = arith.cmpf ogt, %42, %49 : vector<32x256xf32>
    %51 = arith.select %50, %40, %48 : vector<32x256xi1>, vector<32x256xf32>
    %c0_30 = arith.constant 0 : index
    %c0_31 = arith.constant 0 : index
    %52 = vector.load %arg11[%c0_30, %c0_31] : memref<32x1xf32, #tpu.memory_space<vmem>>, vector<32x1xf32>
    %c0_32 = arith.constant 0 : index
    %c0_33 = arith.constant 0 : index
    %53 = vector.load %arg6[%c0_32, %c0_33] : memref<32x32xf32, #tpu.memory_space<vmem>>, vector<32x32xf32>
    %cst_34 = arith.constant dense<0.000000e+00> : vector<32x256xf32>
    %54 = tpu.matmul %53, %51, %cst_34 {dimension_numbers = #tpu.dot_dimension_numbers<[1], [0], [0], [1], [0, 0, 1, 1], [], []>} : vector<32x32xf32>, vector<32x256xf32>, vector<32x256xf32> -> vector<32x256xf32>
    %55 = vector.broadcast %52 : vector<32x1xf32> to vector<32x256xf32>
    %56 = arith.addf %54, %55 : vector<32x256xf32>
    %cst_35 = arith.constant 1.000000e+02 : f32
    %57 = vector.broadcast %cst_35 : f32 to vector<32x256xf32>
    %58 = arith.mulf %57, %56 : vector<32x256xf32>
    %cst_36 = arith.constant 2.000000e+01 : f32
    %59 = vector.broadcast %cst_36 : f32 to vector<32x256xf32>
    %60 = arith.minimumf %58, %59 : vector<32x256xf32>
    %61 = math.exp %60 : vector<32x256xf32>
    %62 = math.log1p %61 : vector<32x256xf32>
    %cst_37 = arith.constant 0.00999999977 : f32
    %63 = vector.broadcast %cst_37 : f32 to vector<32x256xf32>
    %64 = arith.mulf %62, %63 : vector<32x256xf32>
    %cst_38 = arith.constant 2.000000e+01 : f32
    %65 = vector.broadcast %cst_38 : f32 to vector<32x256xf32>
    %66 = arith.cmpf ogt, %58, %65 : vector<32x256xf32>
    %67 = arith.select %66, %56, %64 : vector<32x256xi1>, vector<32x256xf32>
    %c0_39 = arith.constant 0 : index
    %c0_40 = arith.constant 0 : index
    %68 = vector.load %arg12[%c0_39, %c0_40] : memref<1x1xf32, #tpu.memory_space<vmem>>, vector<1x1xf32>
    %c0_41 = arith.constant 0 : index
    %c0_42 = arith.constant 0 : index
    %69 = vector.load %arg7[%c0_41, %c0_42] : memref<1x32xf32, #tpu.memory_space<vmem>>, vector<1x32xf32>
    %cst_43 = arith.constant dense<0.000000e+00> : vector<1x256xf32>
    %70 = tpu.matmul %69, %67, %cst_43 {dimension_numbers = #tpu.dot_dimension_numbers<[1], [0], [0], [1], [0, 0, 1, 1], [], []>} : vector<1x32xf32>, vector<32x256xf32>, vector<1x256xf32> -> vector<1x256xf32>
    %71 = vector.broadcast %68 : vector<1x1xf32> to vector<1x256xf32>
    %72 = arith.addf %70, %71 : vector<1x256xf32>
    %c0_44 = arith.constant 0 : index
    %c0_45 = arith.constant 0 : index
    %73 = vector.load %arg13[%c0_44, %c0_45] : memref<1x256xf32, #tpu.memory_space<vmem>>, vector<1x256xf32>
    tpu.vector_store %arg13[%c0_44, %c0_45], %72 {strides = array<i32>} : memref<1x256xf32, #tpu.memory_space<vmem>>, vector<1x256xf32>,
    return
  }
  func.func @transform_0(%arg0: i32) -> (i32, i32) {
    %c0_i32 = arith.constant 0 : i32
    %c0_i32_0 = arith.constant 0 : i32
    return %c0_i32, %arg0 : i32, i32
  }
  func.func @transform_1(%arg0: i32) -> (i32, i32) {
    %c0_i32 = arith.constant 0 : i32
    %c0_i32_0 = arith.constant 0 : i32
    %c0_i32_1 = arith.constant 0 : i32
    return %c0_i32, %c0_i32_0 : i32, i32
  }
  func.func @transform_2(%arg0: i32) -> (i32, i32) {
    %c0_i32 = arith.constant 0 : i32
    %c0_i32_0 = arith.constant 0 : i32
    %c0_i32_1 = arith.constant 0 : i32
    return %c0_i32, %c0_i32_0 : i32, i32
  }
  func.func @transform_3(%arg0: i32) -> (i32, i32) {
    %c0_i32 = arith.constant 0 : i32
    %c0_i32_0 = arith.constant 0 : i32
    %c0_i32_1 = arith.constant 0 : i32
    return %c0_i32, %c0_i32_0 : i32, i32
  }
  func.func @transform_4(%arg0: i32) -> (i32, i32) {
    %c0_i32 = arith.constant 0 : i32
    %c0_i32_0 = arith.constant 0 : i32
    %c0_i32_1 = arith.constant 0 : i32
    return %c0_i32, %c0_i32_0 : i32, i32
  }
  func.func @transform_5(%arg0: i32) -> (i32, i32) {
    %c0_i32 = arith.constant 0 : i32
    %c0_i32_0 = arith.constant 0 : i32
    %c0_i32_1 = arith.constant 0 : i32
    return %c0_i32, %c0_i32_0 : i32, i32
  }
  func.func @transform_6(%arg0: i32) -> (i32, i32) {
    %c0_i32 = arith.constant 0 : i32
    %c0_i32_0 = arith.constant 0 : i32
    %c0_i32_1 = arith.constant 0 : i32
    return %c0_i32, %c0_i32_0 : i32, i32
  }
  func.func @transform_7(%arg0: i32) -> (i32, i32) {
    %c0_i32 = arith.constant 0 : i32
    %c0_i32_0 = arith.constant 0 : i32
    %c0_i32_1 = arith.constant 0 : i32
    return %c0_i32, %c0_i32_0 : i32, i32
  }
  func.func @transform_8(%arg0: i32) -> (i32, i32) {
    %c0_i32 = arith.constant 0 : i32
    %c0_i32_0 = arith.constant 0 : i32
    %c0_i32_1 = arith.constant 0 : i32
    return %c0_i32, %c0_i32_0 : i32, i32
  }
  func.func @transform_9(%arg0: i32) -> (i32, i32) {
    %c0_i32 = arith.constant 0 : i32
    %c0_i32_0 = arith.constant 0 : i32
    %c0_i32_1 = arith.constant 0 : i32
    return %c0_i32, %c0_i32_0 : i32, i32
  }
  func.func @transform_10(%arg0: i32) -> (i32, i32) {
    %c0_i32 = arith.constant 0 : i32
    %c0_i32_0 = arith.constant 0 : i32
    %c0_i32_1 = arith.constant 0 : i32
    return %c0_i32, %c0_i32_0 : i32, i32
  }
  func.func @transform_11(%arg0: i32) -> (i32, i32) {
    %c0_i32 = arith.constant 0 : i32
    %c0_i32_0 = arith.constant 0 : i32
    %c0_i32_1 = arith.constant 0 : i32
    return %c0_i32, %c0_i32_0 : i32, i32
  }
  func.func @transform_12(%arg0: i32) -> (i32, i32) {
    %c0_i32 = arith.constant 0 : i32
    %c0_i32_0 = arith.constant 0 : i32
    return %c0_i32, %arg0 : i32, i32
  }
}

</mosaic_0001>

<llo_original>
// kernel: tpu_custom_call.1
$region0: #{tpu_custom_call.1}
  #allocation0 [shape = 'u32[]', space=smem, size = 0x4, offset = 0x4, fixed_abs, tag = 'smem constant byte address 0x4 - core index']
  #allocation1 [shape = 'u32[144,128]{1,0:T(1,128)}', space=vmem, size = 0x12000, scoped, tag = 'internal scratch']
  #allocation2 [shape = 'f32[1,1]{1,0:T(1,128)S(1)}', space=vmem, size = 0x200, scoped, tag = 'scoped memory for tpu_custom_call.1']
  %s0 = inlined_call_operand.vmem [shape: f32[3,512], index: 0, kind: input, shape index: {}]
  %s1 = inlined_call_operand.vmem [shape: f32[32,3], index: 1, kind: input, shape index: {}]
  %s2 = inlined_call_operand.vmem [shape: f32[29,32], index: 2, kind: input, shape index: {}]
  %s3 = inlined_call_operand.vmem [shape: f32[32,29], index: 3, kind: input, shape index: {}]
  %s4 = inlined_call_operand.vmem [shape: f32[32,3], index: 4, kind: input, shape index: {}]
  %s5 = inlined_call_operand.vmem [shape: f32[32,32], index: 5, kind: input, shape index: {}]
  %s6 = inlined_call_operand.vmem [shape: f32[1,32], index: 6, kind: input, shape index: {}]
  %s7 = inlined_call_operand.vmem [shape: f32[32,1], index: 7, kind: input, shape index: {}]
  %s8 = inlined_call_operand.vmem [shape: f32[29,1], index: 8, kind: input, shape index: {}]
  %s9 = inlined_call_operand.vmem [shape: f32[32,1], index: 9, kind: input, shape index: {}]
  %s10 = inlined_call_operand.vmem [shape: f32[32,1], index: 10, kind: input, shape index: {}]
  %s11 = inlined_call_operand.<no memory space> [shape: f32[1,1], index: 11, kind: input, shape index: {}]
  %s12 = inlined_call_operand.hbm [shape: f32[1,512], index: 12, kind: output, shape index: {}]
  %s13 = sld [smem:[#allocation0]]
  $region81: #{tpu_custom_call.1} parent=0
    _
  %s15 = ssub.s32 1, %s13
  %s16 = scalar_select 0, %s15, %s13
  %v17 = vstv %s11
  %18 = vst [vmem:[#allocation2] sm:$0x1] %v17
  $region1: #{tpu_custom_call.1} parent=0
    #allocation3 [shape = 'u8[2048]{0}', space=vmem, size = 0x800, scoped, tag = 'output window, operand 0']
    #allocation4 [shape = 's32[2]{0}', space=sflag, size = 0x8, scoped, tag = 'scoped memory for tpu_custom_call.1']
    %19 = vsyncpa [#allocation4], 0
    %s20 = scalar_lea.sflag [#allocation4], 1
    %21 = vsyncpa %s20, 0
    loop: start=0, step=1, limit=4
    $region2: #{tpu_custom_call.1} parent=1 // loop_pre_header
      _
    $region3: #{tpu_custom_call.1} parent=1 // loop_header
      %s23 = sphi 0, %s27
      %p24 = scmp.ge.s32.totalorder %s23, 4
      %s33 = sphi 0, %s35
      %s36 = sphi 0, %s33
      %s37 = sphi 0, %s36
      %s53 = sphi 0, %s37
      %s57 = sphi 0, %s57
      %s59 = sphi 0, %s57
      %s60 = sphi 0, %s59
      %s74 = sphi 0, %s60
      %s78 = sphi 0, %s78
      %s80 = sphi 0, %s78
      %s81 = sphi 0, %s80
      %s95 = sphi 0, %s81
      %s99 = sphi 0, %s99
      %s101 = sphi 0, %s99
      %s102 = sphi 0, %s101
      %s116 = sphi 0, %s102
      %s120 = sphi 0, %s120
      %s122 = sphi 0, %s120
      %s123 = sphi 0, %s122
      %s137 = sphi 0, %s123
      %s141 = sphi 0, %s141
      %s143 = sphi 0, %s141
      %s144 = sphi 0, %s143
      %s158 = sphi 0, %s144
      %s162 = sphi 0, %s162
      %s164 = sphi 0, %s162
      %s165 = sphi 0, %s164
      %s179 = sphi 0, %s165
      %s183 = sphi 0, %s183
      %s185 = sphi 0, %s183
      %s186 = sphi 0, %s185
      %s200 = sphi 0, %s186
      %s204 = sphi 0, %s204
      %s206 = sphi 0, %s204
      %s207 = sphi 0, %s206
      %s221 = sphi 0, %s207
      %s225 = sphi 0, %s225
      %s227 = sphi 0, %s225
      %s228 = sphi 0, %s227
      %s242 = sphi 0, %s228
      %s246 = sphi 0, %s246
      %s248 = sphi 0, %s246
      %s249 = sphi 0, %s248
      %s263 = sphi 0, %s249
      %s267 = sphi 0, %s267
      %s269 = sphi 0, %s267
      %s270 = sphi 0, %s269
      %s284 = sphi 0, %s270
      %s290 = sphi 0, %s292
      %s293 = sphi 0, %s290
      %s294 = sphi 0, %s293
      %s310 = sphi 0, %s294
    $region4: #{tpu_custom_call.1} parent=1 // loop_header_branch
      %26 = sbr.rel (%p24) target = $region8
    $region5: #{tpu_custom_call.1} parent=1 // loop_body
      %s28 = ssub.s32 %s23, 1
      %s29 = ssub.s32 %s23, 2
      %s30 = sadd.s32 %s23, 1
      %s31 = ssub.s32 %s23, %s30
      %p32 = scmp.eq.s32.totalorder %s31, 0
      %s34 = sadd.s32 %s33, 1
      %s35 = scalar_select %p32, %s33, %s34
      %p38 = pneg %p32
      %p39 = scmp.eq.s32.totalorder %s23, 1
      %p40 = por %p38, %p39
      %p41 = scmp.ne.s32.totalorder %s33, %s36
      %p42 = scmp.eq.s32.totalorder %s23, 0
      %p43 = por %p41, %p42
      %p44 = scmp.ne.s32.totalorder %s33, %s36
      %p45 = scmp.eq.s32.totalorder %s28, 1
      %p46 = por %p44, %p45
      %p47 = scmp.ne.s32.totalorder %s36, %s37
      %p48 = scmp.eq.s32.totalorder %s28, 0
      %p49 = por %p47, %p48
      %p50 = scmp.ne.s32.totalorder %s36, %s37
      %p51 = scmp.eq.s32.totalorder %s29, 1
      %p52 = por %p50, %p51
      %p54 = scmp.ne.s32.totalorder %s37, %s53
      %p55 = scmp.eq.s32.totalorder %s29, 0
      %p56 = por %p54, %p55
      %s58 = sadd.s32 %s57, 1
      %p61 = scmp.eq.s32.totalorder %s23, 1
      %p62 = scmp.ne.s32.totalorder %s57, %s59
      %p63 = scmp.eq.s32.totalorder %s23, 0
      %p64 = por %p62, %p63
      %p65 = scmp.ne.s32.totalorder %s57, %s59
      %p66 = scmp.eq.s32.totalorder %s28, 1
      %p67 = por %p65, %p66
      %p68 = scmp.ne.s32.totalorder %s59, %s60
      %p69 = scmp.eq.s32.totalorder %s28, 0
      %p70 = por %p68, %p69
      %p71 = scmp.ne.s32.totalorder %s59, %s60
      %p72 = scmp.eq.s32.totalorder %s29, 1
      %p73 = por %p71, %p72
      %p75 = scmp.ne.s32.totalorder %s60, %s74
      %p76 = scmp.eq.s32.totalorder %s29, 0
      %p77 = por %p75, %p76
      %s79 = sadd.s32 %s78, 1
      %p82 = scmp.eq.s32.totalorder %s23, 1
      %p83 = scmp.ne.s32.totalorder %s78, %s80
      %p84 = scmp.eq.s32.totalorder %s23, 0
      %p85 = por %p83, %p84
      %p86 = scmp.ne.s32.totalorder %s78, %s80
      %p87 = scmp.eq.s32.totalorder %s28, 1
      %p88 = por %p86, %p87
      %p89 = scmp.ne.s32.totalorder %s80, %s81
      %p90 = scmp.eq.s32.totalorder %s28, 0
      %p91 = por %p89, %p90
      %p92 = scmp.ne.s32.totalorder %s80, %s81
      %p93 = scmp.eq.s32.totalorder %s29, 1
      %p94 = por %p92, %p93
      %p96 = scmp.ne.s32.totalorder %s81, %s95
      %p97 = scmp.eq.s32.totalorder %s29, 0
      %p98 = por %p96, %p97
      %s100 = sadd.s32 %s99, 1
      %p103 = scmp.eq.s32.totalorder %s23, 1
      %p104 = scmp.ne.s32.totalorder %s99, %s101
      %p105 = scmp.eq.s32.totalorder %s23, 0
      %p106 = por %p104, %p105
      %p107 = scmp.ne.s32.totalorder %s99, %s101
      %p108 = scmp.eq.s32.totalorder %s28, 1
      %p109 = por %p107, %p108
      %p110 = scmp.ne.s32.totalorder %s101, %s102
      %p111 = scmp.eq.s32.totalorder %s28, 0
      %p112 = por %p110, %p111
      %p113 = scmp.ne.s32.totalorder %s101, %s102
      %p114 = scmp.eq.s32.totalorder %s29, 1
      %p115 = por %p113, %p114
      %p117 = scmp.ne.s32.totalorder %s102, %s116
      %p118 = scmp.eq.s32.totalorder %s29, 0
      %p119 = por %p117, %p118
      %s121 = sadd.s32 %s120, 1
      %p124 = scmp.eq.s32.totalorder %s23, 1
      %p125 = scmp.ne.s32.totalorder %s120, %s122
      %p126 = scmp.eq.s32.totalorder %s23, 0
      %p127 = por %p125, %p126
      %p128 = scmp.ne.s32.totalorder %s120, %s122
      %p129 = scmp.eq.s32.totalorder %s28, 1
      %p130 = por %p128, %p129
      %p131 = scmp.ne.s32.totalorder %s122, %s123
      %p132 = scmp.eq.s32.totalorder %s28, 0
      %p133 = por %p131, %p132
      %p134 = scmp.ne.s32.totalorder %s122, %s123
      %p135 = scmp.eq.s32.totalorder %s29, 1
      %p136 = por %p134, %p135
      %p138 = scmp.ne.s32.totalorder %s123, %s137
      %p139 = scmp.eq.s32.totalorder %s29, 0
      %p140 = por %p138, %p139
      %s142 = sadd.s32 %s141, 1
      %p145 = scmp.eq.s32.totalorder %s23, 1
      %p146 = scmp.ne.s32.totalorder %s141, %s143
      %p147 = scmp.eq.s32.totalorder %s23, 0
      %p148 = por %p146, %p147
      %p149 = scmp.ne.s32.totalorder %s141, %s143
      %p150 = scmp.eq.s32.totalorder %s28, 1
      %p151 = por %p149, %p150
      %p152 = scmp.ne.s32.totalorder %s143, %s144
      %p153 = scmp.eq.s32.totalorder %s28, 0
      %p154 = por %p152, %p153
      %p155 = scmp.ne.s32.totalorder %s143, %s144
      %p156 = scmp.eq.s32.totalorder %s29, 1
      %p157 = por %p155, %p156
      %p159 = scmp.ne.s32.totalorder %s144, %s158
      %p160 = scmp.eq.s32.totalorder %s29, 0
      %p161 = por %p159, %p160
      %s163 = sadd.s32 %s162, 1
      %p166 = scmp.eq.s32.totalorder %s23, 1
      %p167 = scmp.ne.s32.totalorder %s162, %s164
      %p168 = scmp.eq.s32.totalorder %s23, 0
      %p169 = por %p167, %p168
      %p170 = scmp.ne.s32.totalorder %s162, %s164
      %p171 = scmp.eq.s32.totalorder %s28, 1
      %p172 = por %p170, %p171
      %p173 = scmp.ne.s32.totalorder %s164, %s165
      %p174 = scmp.eq.s32.totalorder %s28, 0
      %p175 = por %p173, %p174
      %p176 = scmp.ne.s32.totalorder %s164, %s165
      %p177 = scmp.eq.s32.totalorder %s29, 1
      %p178 = por %p176, %p177
      %p180 = scmp.ne.s32.totalorder %s165, %s179
      %p181 = scmp.eq.s32.totalorder %s29, 0
      %p182 = por %p180, %p181
      %s184 = sadd.s32 %s183, 1
      %p187 = scmp.eq.s32.totalorder %s23, 1
      %p188 = scmp.ne.s32.totalorder %s183, %s185
      %p189 = scmp.eq.s32.totalorder %s23, 0
      %p190 = por %p188, %p189
      %p191 = scmp.ne.s32.totalorder %s183, %s185
      %p192 = scmp.eq.s32.totalorder %s28, 1
      %p193 = por %p191, %p192
      %p194 = scmp.ne.s32.totalorder %s185, %s186
      %p195 = scmp.eq.s32.totalorder %s28, 0
      %p196 = por %p194, %p195
      %p197 = scmp.ne.s32.totalorder %s185, %s186
      %p198 = scmp.eq.s32.totalorder %s29, 1
      %p199 = por %p197, %p198
      %p201 = scmp.ne.s32.totalorder %s186, %s200
      %p202 = scmp.eq.s32.totalorder %s29, 0
      %p203 = por %p201, %p202
      %s205 = sadd.s32 %s204, 1
      %p208 = scmp.eq.s32.totalorder %s23, 1
      %p209 = scmp.ne.s32.totalorder %s204, %s206
      %p210 = scmp.eq.s32.totalorder %s23, 0
      %p211 = por %p209, %p210
      %p212 = scmp.ne.s32.totalorder %s204, %s206
      %p213 = scmp.eq.s32.totalorder %s28, 1
      %p214 = por %p212, %p213
      %p215 = scmp.ne.s32.totalorder %s206, %s207
      %p216 = scmp.eq.s32.totalorder %s28, 0
      %p217 = por %p215, %p216
      %p218 = scmp.ne.s32.totalorder %s206, %s207
      %p219 = scmp.eq.s32.totalorder %s29, 1
      %p220 = por %p218, %p219
      %p222 = scmp.ne.s32.totalorder %s207, %s221
      %p223 = scmp.eq.s32.totalorder %s29, 0
      %p224 = por %p222, %p223
      %s226 = sadd.s32 %s225, 1
      %p229 = scmp.eq.s32.totalorder %s23, 1
      %p230 = scmp.ne.s32.totalorder %s225, %s227
      %p231 = scmp.eq.s32.totalorder %s23, 0
      %p232 = por %p230, %p231
      %p233 = scmp.ne.s32.totalorder %s225, %s227
      %p234 = scmp.eq.s32.totalorder %s28, 1
      %p235 = por %p233, %p234
      %p236 = scmp.ne.s32.totalorder %s227, %s228
      %p237 = scmp.eq.s32.totalorder %s28, 0
      %p238 = por %p236, %p237
      %p239 = scmp.ne.s32.totalorder %s227, %s228
      %p240 = scmp.eq.s32.totalorder %s29, 1
      %p241 = por %p239, %p240
      %p243 = scmp.ne.s32.totalorder %s228, %s242
      %p244 = scmp.eq.s32.totalorder %s29, 0
      %p245 = por %p243, %p244
      %s247 = sadd.s32 %s246, 1
      %p250 = scmp.eq.s32.totalorder %s23, 1
      %p251 = scmp.ne.s32.totalorder %s246, %s248
      %p252 = scmp.eq.s32.totalorder %s23, 0
      %p253 = por %p251, %p252
      %p254 = scmp.ne.s32.totalorder %s246, %s248
      %p255 = scmp.eq.s32.totalorder %s28, 1
      %p256 = por %p254, %p255
      %p257 = scmp.ne.s32.totalorder %s248, %s249
      %p258 = scmp.eq.s32.totalorder %s28, 0
      %p259 = por %p257, %p258
      %p260 = scmp.ne.s32.totalorder %s248, %s249
      %p261 = scmp.eq.s32.totalorder %s29, 1
      %p262 = por %p260, %p261
      %p264 = scmp.ne.s32.totalorder %s249, %s263
      %p265 = scmp.eq.s32.totalorder %s29, 0
      %p266 = por %p264, %p265
      %s268 = sadd.s32 %s267, 1
      %p271 = scmp.eq.s32.totalorder %s23, 1
      %p272 = scmp.ne.s32.totalorder %s267, %s269
      %p273 = scmp.eq.s32.totalorder %s23, 0
      %p274 = por %p272, %p273
      %p275 = scmp.ne.s32.totalorder %s267, %s269
      %p276 = scmp.eq.s32.totalorder %s28, 1
      %p277 = por %p275, %p276
      %p278 = scmp.ne.s32.totalorder %s269, %s270
      %p279 = scmp.eq.s32.totalorder %s28, 0
      %p280 = por %p278, %p279
      %p281 = scmp.ne.s32.totalorder %s269, %s270
      %p282 = scmp.eq.s32.totalorder %s29, 1
      %p283 = por %p281, %p282
      %p285 = scmp.ne.s32.totalorder %s270, %s284
      %p286 = scmp.eq.s32.totalorder %s29, 0
      %p287 = por %p285, %p286
      %s288 = ssub.s32 %s23, %s30
      %p289 = scmp.eq.s32.totalorder %s288, 0
      %s291 = sadd.s32 %s290, 1
      %s292 = scalar_select %p289, %s290, %s291
      %p295 = pneg %p289
      %p296 = scmp.eq.s32.totalorder %s23, 1
      %p297 = por %p295, %p296
      %p298 = scmp.ne.s32.totalorder %s290, %s293
      %p299 = scmp.eq.s32.totalorder %s23, 0
      %p300 = por %p298, %p299
      %p301 = scmp.ne.s32.totalorder %s290, %s293
      %p302 = scmp.eq.s32.totalorder %s28, 1
      %p303 = por %p301, %p302
      %p304 = scmp.ne.s32.totalorder %s293, %s294
      %p305 = scmp.eq.s32.totalorder %s28, 0
      %p306 = por %p304, %p305
      %p307 = scmp.ne.s32.totalorder %s293, %s294
      %p308 = scmp.eq.s32.totalorder %s29, 1
      %p309 = por %p307, %p308
      %p311 = scmp.ne.s32.totalorder %s294, %s310
      %p312 = scmp.eq.s32.totalorder %s29, 0
      %p313 = por %p311, %p312
      %p314 = scmp.le.s32.totalorder 1, %s23
      %p315 = scmp.lt.s32.totalorder %s23, 3
      %p316 = pnand %p314, %p315
      %p317 = pneg %p316
      // Predicated region
      $region9: #{tpu_custom_call.1} parent=5 // pred_check
        _
      $region10: #{tpu_custom_call.1} parent=5 // pred_check_branch
        %319 = sbr.rel (%p316) target = $region12
      $region11: #{tpu_custom_call.1} parent=5 // pred_region
        %s320 = ssub.s32 %s23, 1
        // Predicated region
        $region13: #{tpu_custom_call.1} parent=11 // pred_check
          %p321 = pneg %p70
        $region14: #{tpu_custom_call.1} parent=11 // pred_check_branch
          %323 = sbr.rel (%p321) target = $region16
        $region15: #{tpu_custom_call.1} parent=11 // pred_region
          _
        $region16: #{tpu_custom_call.1} parent=11 // pred_fallthru
          _
        // Predicated region
        $region17: #{tpu_custom_call.1} parent=11 // pred_check
          %p324 = pneg %p91
        $region18: #{tpu_custom_call.1} parent=11 // pred_check_branch
          %326 = sbr.rel (%p324) target = $region20
        $region19: #{tpu_custom_call.1} parent=11 // pred_region
          _
        $region20: #{tpu_custom_call.1} parent=11 // pred_fallthru
          _
        // Predicated region
        $region21: #{tpu_custom_call.1} parent=11 // pred_check
          %p327 = pneg %p112
        $region22: #{tpu_custom_call.1} parent=11 // pred_check_branch
          %329 = sbr.rel (%p327) target = $region24
        $region23: #{tpu_custom_call.1} parent=11 // pred_region
          _
        $region24: #{tpu_custom_call.1} parent=11 // pred_fallthru
          _
        // Predicated region
        $region25: #{tpu_custom_call.1} parent=11 // pred_check
          %p330 = pneg %p133
        $region26: #{tpu_custom_call.1} parent=11 // pred_check_branch
          %332 = sbr.rel (%p330) target = $region28
        $region27: #{tpu_custom_call.1} parent=11 // pred_region
          _
        $region28: #{tpu_custom_call.1} parent=11 // pred_fallthru
          _
        // Predicated region
        $region29: #{tpu_custom_call.1} parent=11 // pred_check
          %p333 = pneg %p154
        $region30: #{tpu_custom_call.1} parent=11 // pred_check_branch
          %335 = sbr.rel (%p333) target = $region32
        $region31: #{tpu_custom_call.1} parent=11 // pred_region
          _
        $region32: #{tpu_custom_call.1} parent=11 // pred_fallthru
          _
        // Predicated region
        $region33: #{tpu_custom_call.1} parent=11 // pred_check
          %p336 = pneg %p175
        $region34: #{tpu_custom_call.1} parent=11 // pred_check_branch
          %338 = sbr.rel (%p336) target = $region36
        $region35: #{tpu_custom_call.1} parent=11 // pred_region
          _
        $region36: #{tpu_custom_call.1} parent=11 // pred_fallthru
          _
        // Predicated region
        $region37: #{tpu_custom_call.1} parent=11 // pred_check
          %p339 = pneg %p196
        $region38: #{tpu_custom_call.1} parent=11 // pred_check_branch
          %341 = sbr.rel (%p339) target = $region40
        $region39: #{tpu_custom_call.1} parent=11 // pred_region
          _
        $region40: #{tpu_custom_call.1} parent=11 // pred_fallthru
          _
        // Predicated region
        $region41: #{tpu_custom_call.1} parent=11 // pred_check
          %p342 = pneg %p217
        $region42: #{tpu_custom_call.1} parent=11 // pred_check_branch
          %344 = sbr.rel (%p342) target = $region44
        $region43: #{tpu_custom_call.1} parent=11 // pred_region
          _
        $region44: #{tpu_custom_call.1} parent=11 // pred_fallthru
          _
        // Predicated region
        $region45: #{tpu_custom_call.1} parent=11 // pred_check
          %p345 = pneg %p238
        $region46: #{tpu_custom_call.1} parent=11 // pred_check_branch
          %347 = sbr.rel (%p345) target = $region48
        $region47: #{tpu_custom_call.1} parent=11 // pred_region
          _
        $region48: #{tpu_custom_call.1} parent=11 // pred_fallthru
          _
        // Predicated region
        $region49: #{tpu_custom_call.1} parent=11 // pred_check
          %p348 = pneg %p259
        $region50: #{tpu_custom_call.1} parent=11 // pred_check_branch
          %350 = sbr.rel (%p348) target = $region52
        $region51: #{tpu_custom_call.1} parent=11 // pred_region
          _
        $region52: #{tpu_custom_call.1} parent=11 // pred_fallthru
          _
        // Predicated region
        $region53: #{tpu_custom_call.1} parent=11 // pred_check
          %p351 = pneg %p280
        $region54: #{tpu_custom_call.1} parent=11 // pred_check_branch
          %353 = sbr.rel (%p351) target = $region56
        $region55: #{tpu_custom_call.1} parent=11 // pred_region
          _
        $region56: #{tpu_custom_call.1} parent=11 // pred_fallthru
          _
      $region12: #{tpu_custom_call.1} parent=5 // pred_fallthru
        _
      %p354 = scmp.lt.s32.totalorder %s23, 2
      // Predicated region
      $region57: #{tpu_custom_call.1} parent=5 // pred_check
        %p355 = pneg %p354
      $region58: #{tpu_custom_call.1} parent=5 // pred_check_branch
        %357 = sbr.rel (%p355) target = $region60
      $region59: #{tpu_custom_call.1} parent=5 // pred_region
        // Predicated region
        $region61: #{tpu_custom_call.1} parent=59 // pred_check
          %p358 = pneg %p43
        $region62: #{tpu_custom_call.1} parent=59 // pred_check_branch
          %360 = sbr.rel (%p358) target = $region64
        $region63: #{tpu_custom_call.1} parent=59 // pred_region
          %s361 = smul.u32 2, %s23
          %p362 = scmp.lt.s32.totalorder %s361, 3
          %s363 = scalar_select %p362, %s361, 3
          %s364 = smul.addr %s363, 4
          %s365 = scalar_lea.vmem %s0, %s364
          %s366 = smul.u32 2, %s23
        $region64: #{tpu_custom_call.1} parent=59 // pred_fallthru
          _
      $region60: #{tpu_custom_call.1} parent=5 // pred_fallthru
        _
      %p367 = scmp.le.s32.totalorder 1, %s23
      %p368 = scmp.lt.s32.totalorder %s23, 3
      %p369 = pnand %p367, %p368
      %p370 = pneg %p369
      // Predicated region
      $region65: #{tpu_custom_call.1} parent=5 // pred_check
        _
      $region66: #{tpu_custom_call.1} parent=5 // pred_check_branch
        %372 = sbr.rel (%p369) target = $region68
      $region67: #{tpu_custom_call.1} parent=5 // pred_region
        %s373 = ssub.s32 %s23, 1
        %s374 = smul.u32 2, %s28
        %p375 = scmp.lt.s32.totalorder %s374, 3
        %s376 = scalar_select %p375, %s374, 3
        %s377 = smul.addr %s376, 4
        %s378 = scalar_lea.vmem %s0, %s377
        %p379 = pneg %p49
        %p380 = pneg %p46
        %p381 = pneg %p70
        %p382 = pneg %p67
        %p383 = pneg %p91
        %p384 = pneg %p88
        %p385 = pneg %p112
        %p386 = pneg %p109
        %p387 = pneg %p133
        %p388 = pneg %p130
        %p389 = pneg %p154
        %p390 = pneg %p151
        %p391 = pneg %p175
        %p392 = pneg %p172
        %p393 = pneg %p196
        %p394 = pneg %p193
        %p395 = pneg %p217
        %p396 = pneg %p214
        %p397 = pneg %p238
        %p398 = pneg %p235
        %p399 = pneg %p259
        %p400 = pneg %p256
        %p401 = pneg %p280
        %p402 = pneg %p277
        %p403 = pneg %p306
        %p404 = pneg %p303
        %s405 = sand.u32 %s293, 1
        %s406 = scalar_lea.sflag [#allocation4], %s405
        %s407 = sand.u32 %s293, 1
        %s408 = smul.addr %s407, 2
        %s409 = scalar_lea.vmem [#allocation3], %s408
        %s410 = smul.u32 2, %s28
        %p411 = scmp.lt.s32.totalorder %s410, 3
        %s412 = scalar_select %p411, %s410, 3
        %s413 = smul.addr %s412, 4
        %s414 = scalar_lea.vmem %s0, %s413
        %s415 = smul.u32 2, %s28
        %s416 = smul.u32 2, %s28
        %v417 = vld [vmem:[%s414] sm:$0x77]
        %v418 = vld [vmem:[%s7] sm:$0xff]
        %v419 = vld [vmem:[%s7 + $0x8] sm:$0xff]
        %v420 = vld [vmem:[%s7 + $0x10] sm:$0xff]
        %v421 = vld [vmem:[%s7 + $0x18] sm:$0xff]
        %v422 = vld [vmem:[%s1] sm:$0xff]
        %v423 = vld [vmem:[%s1 + $0x8] sm:$0xff]
        %v424 = vld [vmem:[%s1 + $0x10] sm:$0xff]
        %v425 = vld [vmem:[%s1 + $0x18] sm:$0xff]
        %427 = vset.pattern.permute.xlu0 0
        %428 = vperm.xlu0 %427, %v418
        %v429 = vpop.permute.xlu0 %428
        %432 = vset.pattern.permute.xlu0 0
        %433 = vperm.xlu0 %432, %v419
        %v434 = vpop.permute.xlu0 %433
        %437 = vset.pattern.permute.xlu0 0
        %438 = vperm.xlu0 %437, %v420
        %v439 = vpop.permute.xlu0 %438
        %442 = vset.pattern.permute.xlu0 0
        %443 = vperm.xlu0 %442, %v421
        %v444 = vpop.permute.xlu0 %443
        %v447 = vcombine.high %v417, %v417
        %vm448 = vcmask 23552
        %v450 = vsel %vm448, %v422, 0
        %v453 = vsel %vm448, %v423, 0
        %v456 = vsel %vm448, %v424, 0
        %v459 = vsel %vm448, %v425, 0
        %vm461 = vcmask 1042432
        %v462 = vsel %vm461, %v417, 0
        %v464 = vsel %vm461, %v447, 0
        %466 = vmatprep.subr.mxu0 %v464
        %467 = vmatpush1.msra.mxu0 %v462
        %468 = vmatprep.subr.mxu0 0.0
        %469 = vmatpush1.msra.mxu0 0.0
        %470 = vmatprep.subr.mxu0 0.0
        %471 = vmatpush1.msra.mxu0 0.0
        %472 = vmatprep.subr.mxu0 0.0
        %473 = vmatpush1.msra.mxu0 0.0
        %474 = vmatprep.subr.mxu0 0.0
        %475 = vmatpush1.msra.mxu0 0.0
        %476 = vmatprep.subr.mxu0 0.0
        %477 = vmatpush1.msra.mxu0 0.0
        %478 = vmatprep.subr.mxu0 0.0
        %479 = vmatpush1.msra.mxu0 0.0
        %480 = vmatprep.subr.mxu0 0.0
        %481 = vmatpush1.msra.mxu0 0.0
        %482 = vmatprep.subr.mxu0 0.0
        %483 = vmatpush1.msra.mxu0 0.0
        %484 = vmatprep.subr.mxu0 0.0
        %485 = vmatpush1.msra.mxu0 0.0
        %486 = vmatprep.subr.mxu0 0.0
        %487 = vmatpush1.msra.mxu0 0.0
        %488 = vmatprep.subr.mxu0 0.0
        %489 = vmatpush1.msra.mxu0 0.0
        %490 = vmatprep.subr.mxu0 0.0
        %491 = vmatpush1.msra.mxu0 0.0
        %492 = vmatprep.subr.mxu0 0.0
        %493 = vmatpush1.msra.mxu0 0.0
        %494 = vmatprep.subr.mxu0 0.0
        %495 = vmatpush1.msra.mxu0 0.0
        %496 = vmatprep.subr.mxu0 0.0
        %497 = vmatpush1.msra.mxu0 0.0
        %498 = vmatprep.subr.mxu0 0.0
        %499 = vmatpush1.msra.mxu0 0.0
        %500 = vmatprep.subr.mxu0 0.0
        %501 = vmatpush1.msra.mxu0 0.0
        %502 = vmatprep.subr.mxu0 0.0
        %503 = vmatpush1.msra.mxu0 0.0
        %504 = vmatprep.subr.mxu0 0.0
        %505 = vmatpush1.msra.mxu0 0.0
        %506 = vmatprep.subr.mxu0 0.0
        %507 = vmatpush1.msra.mxu0 0.0
        %508 = vmatprep.subr.mxu0 0.0
        %509 = vmatpush1.msra.mxu0 0.0
        %510 = vmatprep.subr.mxu0 0.0
        %511 = vmatpush1.msra.mxu0 0.0
        %512 = vmatprep.subr.mxu0 0.0
        %513 = vmatpush1.msra.mxu0 0.0
        %514 = vmatprep.subr.mxu0 0.0
        %515 = vmatpush1.msra.mxu0 0.0
        %516 = vmatprep.subr.mxu0 0.0
        %517 = vmatpush1.msra.mxu0 0.0
        %518 = vmatprep.subr.mxu0 0.0
        %519 = vmatpush1.msra.mxu0 0.0
        %520 = vmatprep.subr.mxu0 0.0
        %521 = vmatpush1.msra.mxu0 0.0
        %522 = vmatprep.subr.mxu0 0.0
        %523 = vmatpush1.msra.mxu0 0.0
        %524 = vmatprep.subr.mxu0 0.0
        %525 = vmatpush1.msra.mxu0 0.0
        %526 = vmatprep.subr.mxu0 0.0
        %527 = vmatpush1.msra.mxu0 0.0
        %528 = vmatprep.subr.mxu0 0.0
        %529 = vmatpush1.msra.mxu0 0.0
        %530 = vmatprep.mubr.f32.mxu0 0.0
        %531 = vmatmul.mubr.f32.gmra.mrb[0].mxu0 %v450
        %v532 = vpop.f32.mrb[0].mxu0
        %v533 = vadd.f32 %v429, %v532
        %v534 = vpop.f32.mrb[0].mxu0
        %v535 = vadd.f32 %v429, %v534
        %536 = vmatprep.mubr.f32.mxu0 0.0
        %537 = vmatmul.mubr.f32.gmra.mrb[0].mxu0 %v453
        %v538 = vpop.f32.mrb[0].mxu0
        %v539 = vadd.f32 %v434, %v538
        %v540 = vpop.f32.mrb[0].mxu0
        %v541 = vadd.f32 %v434, %v540
        %542 = vmatprep.mubr.f32.mxu0 0.0
        %543 = vmatmul.mubr.f32.gmra.mrb[0].mxu0 %v456
        %v544 = vpop.f32.mrb[0].mxu0
        %v545 = vadd.f32 %v439, %v544
        %v546 = vpop.f32.mrb[0].mxu0
        %v547 = vadd.f32 %v439, %v546
        %548 = vmatprep.mubr.f32.mxu0 0.0
        %549 = vmatmul.mubr.f32.gmra.mrb[0].mxu0 %v459
        %v550 = vpop.f32.mrb[0].mxu0
        %v551 = vadd.f32 %v444, %v550
        %v552 = vpop.f32.mrb[0].mxu0
        %v553 = vadd.f32 %v444, %v552
        %554 = vdwg.mxu0
        %v555 = vmul.f32 %v533, 100.0
        %v556 = vmul.f32 %v535, 100.0
        %v557 = vmul.f32 %v539, 100.0
        %v558 = vmul.f32 %v541, 100.0
        %v559 = vmul.f32 %v545, 100.0
        %v560 = vmul.f32 %v547, 100.0
        %v561 = vmul.f32 %v551, 100.0
        %v562 = vmul.f32 %v553, 100.0
        %v563 = vmin.f32 %v555, 20.0
        %v564 = vmin.f32 %v556, 20.0
        %v565 = vmin.f32 %v557, 20.0
        %v566 = vmin.f32 %v558, 20.0
        %v567 = vmin.f32 %v559, 20.0
        %v568 = vmin.f32 %v560, 20.0
        %v569 = vmin.f32 %v561, 20.0
        %v570 = vmin.f32 %v562, 20.0
        %v571 = vmul.f32 %v563, 1.442695
        %v572 = vpow.pop %v571
        %v573 = vmul.f32 %v564, 1.442695
        %v574 = vpow.pop %v573
        %v575 = vmul.f32 %v565, 1.442695
        %v576 = vpow.pop %v575
        %v577 = vmul.f32 %v566, 1.442695
        %v578 = vpow.pop %v577
        %v579 = vmul.f32 %v567, 1.442695
        %v580 = vpow.pop %v579
        %v581 = vmul.f32 %v568, 1.442695
        %v582 = vpow.pop %v581
        %v583 = vmul.f32 %v569, 1.442695
        %v584 = vpow.pop %v583
        %v585 = vmul.f32 %v570, 1.442695
        %v586 = vpow.pop %v585
        %v587 = vadd.f32 %v572, 1.0
        %v588 = vlog2.pop %v587
        %v589 = vmul.f32 %v588, 0.6931472
        %v590 = vmul.f32 -0.5, %v572
        %v591 = vadd.f32 %v590, 1.0
        %v592 = vmul.f32 %v591, %v572
        %v593 = vand.u32 2147483647, %v572
        %vm594 = vcmp.lt.f32.partialorder %v593, 0.0004427343
        %v595 = vsel %vm594, %v592, %v589
        %v596 = vadd.f32 %v574, 1.0
        %v597 = vlog2.pop %v596
        %v598 = vmul.f32 %v597, 0.6931472
        %v599 = vmul.f32 -0.5, %v574
        %v600 = vadd.f32 %v599, 1.0
        %v601 = vmul.f32 %v600, %v574
        %v602 = vand.u32 2147483647, %v574
        %vm603 = vcmp.lt.f32.partialorder %v602, 0.0004427343
        %v604 = vsel %vm603, %v601, %v598
        %v605 = vadd.f32 %v576, 1.0
        %v606 = vlog2.pop %v605
        %v607 = vmul.f32 %v606, 0.6931472
        %v608 = vmul.f32 -0.5, %v576
        %v609 = vadd.f32 %v608, 1.0
        %v610 = vmul.f32 %v609, %v576
        %v611 = vand.u32 2147483647, %v576
        %vm612 = vcmp.lt.f32.partialorder %v611, 0.0004427343
        %v613 = vsel %vm612, %v610, %v607
        %v614 = vadd.f32 %v578, 1.0
        %v615 = vlog2.pop %v614
        %v616 = vmul.f32 %v615, 0.6931472
        %v617 = vmul.f32 -0.5, %v578
        %v618 = vadd.f32 %v617, 1.0
        %v619 = vmul.f32 %v618, %v578
        %v620 = vand.u32 2147483647, %v578
        %vm621 = vcmp.lt.f32.partialorder %v620, 0.0004427343
        %v622 = vsel %vm621, %v619, %v616
        %v623 = vadd.f32 %v580, 1.0
        %v624 = vlog2.pop %v623
        %v625 = vmul.f32 %v624, 0.6931472
        %v626 = vmul.f32 -0.5, %v580
        %v627 = vadd.f32 %v626, 1.0
        %v628 = vmul.f32 %v627, %v580
        %v629 = vand.u32 2147483647, %v580
        %vm630 = vcmp.lt.f32.partialorder %v629, 0.0004427343
        %v631 = vsel %vm630, %v628, %v625
        %v632 = vadd.f32 %v582, 1.0
        %v633 = vlog2.pop %v632
        %v634 = vmul.f32 %v633, 0.6931472
        %v635 = vmul.f32 -0.5, %v582
        %v636 = vadd.f32 %v635, 1.0
        %v637 = vmul.f32 %v636, %v582
        %v638 = vand.u32 2147483647, %v582
        %vm639 = vcmp.lt.f32.partialorder %v638, 0.0004427343
        %v640 = vsel %vm639, %v637, %v634
        %v641 = vadd.f32 %v584, 1.0
        %v642 = vlog2.pop %v641
        %v643 = vmul.f32 %v642, 0.6931472
        %v644 = vmul.f32 -0.5, %v584
        %v645 = vadd.f32 %v644, 1.0
        %v646 = vmul.f32 %v645, %v584
        %v647 = vand.u32 2147483647, %v584
        %vm648 = vcmp.lt.f32.partialorder %v647, 0.0004427343
        %v649 = vsel %vm648, %v646, %v643
        %v650 = vadd.f32 %v586, 1.0
        %v651 = vlog2.pop %v650
        %v652 = vmul.f32 %v651, 0.6931472
        %v653 = vmul.f32 -0.5, %v586
        %v654 = vadd.f32 %v653, 1.0
        %v655 = vmul.f32 %v654, %v586
        %v656 = vand.u32 2147483647, %v586
        %vm657 = vcmp.lt.f32.partialorder %v656, 0.0004427343
        %v658 = vsel %vm657, %v655, %v652
        %v659 = vmul.f32 %v595, 0.01
        %v660 = vmul.f32 %v604, 0.01
        %v661 = vmul.f32 %v613, 0.01
        %v662 = vmul.f32 %v622, 0.01
        %v663 = vmul.f32 %v631, 0.01
        %v664 = vmul.f32 %v640, 0.01
        %v665 = vmul.f32 %v649, 0.01
        %v666 = vmul.f32 %v658, 0.01
        %vm667 = vcmp.gt.f32.partialorder %v555, 20.0
        %vm668 = vcmp.gt.f32.partialorder %v556, 20.0
        %vm669 = vcmp.gt.f32.partialorder %v557, 20.0
        %vm670 = vcmp.gt.f32.partialorder %v558, 20.0
        %vm671 = vcmp.gt.f32.partialorder %v559, 20.0
        %vm672 = vcmp.gt.f32.partialorder %v560, 20.0
        %vm673 = vcmp.gt.f32.partialorder %v561, 20.0
        %vm674 = vcmp.gt.f32.partialorder %v562, 20.0
        %v675 = vsel %vm667, %v533, %v659
        %v676 = vsel %vm668, %v535, %v660
        %v677 = vsel %vm669, %v539, %v661
        %v678 = vsel %vm670, %v541, %v662
        %v679 = vsel %vm671, %v545, %v663
        %v680 = vsel %vm672, %v547, %v664
        %v681 = vsel %vm673, %v551, %v665
        %v682 = vsel %vm674, %v553, %v666
        %v683 = vld [vmem:[%s8] sm:$0xff]
        %v684 = vld [vmem:[%s8 + $0x8] sm:$0xff]
        %v685 = vld [vmem:[%s8 + $0x10] sm:$0xff]
        %v686 = vld [vmem:[%s8 + $0x18] sm:$0x1f]
        %v687 = vld [vmem:[%s2] sm:$0xff]
        %v688 = vld [vmem:[%s2 + $0x8] sm:$0xff]
        %v689 = vld [vmem:[%s2 + $0x10] sm:$0xff]
        %v690 = vld [vmem:[%s2 + $0x18] sm:$0x1f]
        %692 = vset.pattern.permute.xlu0 0
        %693 = vperm.xlu0 %692, %v683
        %v694 = vpop.permute.xlu0 %693
        %697 = vset.pattern.permute.xlu0 0
        %698 = vperm.xlu0 %697, %v684
        %v699 = vpop.permute.xlu0 %698
        %702 = vset.pattern.permute.xlu0 0
        %703 = vperm.xlu0 %702, %v685
        %v704 = vpop.permute.xlu0 %703
        %707 = vset.pattern.permute.xlu0 0
        %708 = vperm.xlu0 %707, %v686
        %v709 = vpop.permute.xlu0 %708
        %vm711 = vcmask 261120
        %v713 = vsel %vm711, %v687, 0
        %v716 = vsel %vm711, %v688, 0
        %v719 = vsel %vm711, %v689, 0
        %v722 = vsel %vm711, %v690, 0
        %724 = vmatprep.subr.mxu0 %v676
        %725 = vmatpush1.msra.mxu0 %v675
        %726 = vmatprep.subr.mxu0 %v678
        %727 = vmatpush1.msra.mxu0 %v677
        %728 = vmatprep.subr.mxu0 %v680
        %729 = vmatpush1.msra.mxu0 %v679
        %730 = vmatprep.subr.mxu0 %v682
        %731 = vmatpush1.msra.mxu0 %v681
        %732 = vmatprep.subr.mxu0 0.0
        %733 = vmatpush1.msra.mxu0 0.0
        %734 = vmatprep.subr.mxu0 0.0
        %735 = vmatpush1.msra.mxu0 0.0
        %736 = vmatprep.subr.mxu0 0.0
        %737 = vmatpush1.msra.mxu0 0.0
        %738 = vmatprep.subr.mxu0 0.0
        %739 = vmatpush1.msra.mxu0 0.0
        %740 = vmatprep.subr.mxu0 0.0
        %741 = vmatpush1.msra.mxu0 0.0
        %742 = vmatprep.subr.mxu0 0.0
        %743 = vmatpush1.msra.mxu0 0.0
        %744 = vmatprep.subr.mxu0 0.0
        %745 = vmatpush1.msra.mxu0 0.0
        %746 = vmatprep.subr.mxu0 0.0
        %747 = vmatpush1.msra.mxu0 0.0
        %748 = vmatprep.subr.mxu0 0.0
        %749 = vmatpush1.msra.mxu0 0.0
        %750 = vmatprep.subr.mxu0 0.0
        %751 = vmatpush1.msra.mxu0 0.0
        %752 = vmatprep.subr.mxu0 0.0
        %753 = vmatpush1.msra.mxu0 0.0
        %754 = vmatprep.subr.mxu0 0.0
        %755 = vmatpush1.msra.mxu0 0.0
        %756 = vmatprep.subr.mxu0 0.0
        %757 = vmatpush1.msra.mxu0 0.0
        %758 = vmatprep.subr.mxu0 0.0
        %759 = vmatpush1.msra.mxu0 0.0
        %760 = vmatprep.subr.mxu0 0.0
        %761 = vmatpush1.msra.mxu0 0.0
        %762 = vmatprep.subr.mxu0 0.0
        %763 = vmatpush1.msra.mxu0 0.0
        %764 = vmatprep.subr.mxu0 0.0
        %765 = vmatpush1.msra.mxu0 0.0
        %766 = vmatprep.subr.mxu0 0.0
        %767 = vmatpush1.msra.mxu0 0.0
        %768 = vmatprep.subr.mxu0 0.0
        %769 = vmatpush1.msra.mxu0 0.0
        %770 = vmatprep.subr.mxu0 0.0
        %771 = vmatpush1.msra.mxu0 0.0
        %772 = vmatprep.subr.mxu0 0.0
        %773 = vmatpush1.msra.mxu0 0.0
        %774 = vmatprep.subr.mxu0 0.0
        %775 = vmatpush1.msra.mxu0 0.0
        %776 = vmatprep.subr.mxu0 0.0
        %777 = vmatpush1.msra.mxu0 0.0
        %778 = vmatprep.subr.mxu0 0.0
        %779 = vmatpush1.msra.mxu0 0.0
        %780 = vmatprep.subr.mxu0 0.0
        %781 = vmatpush1.msra.mxu0 0.0
        %782 = vmatprep.subr.mxu0 0.0
        %783 = vmatpush1.msra.mxu0 0.0
        %784 = vmatprep.subr.mxu0 0.0
        %785 = vmatpush1.msra.mxu0 0.0
        %786 = vmatprep.subr.mxu0 0.0
        %787 = vmatpush1.msra.mxu0 0.0
        %788 = vmatprep.mubr.f32.mxu0 0.0
        %789 = vmatmul.mubr.f32.gmra.mrb[0].mxu0 %v713
        %v790 = vpop.f32.mrb[0].mxu0
        %v791 = vadd.f32 %v694, %v790
        %v792 = vpop.f32.mrb[0].mxu0
        %v793 = vadd.f32 %v694, %v792
        %794 = vmatprep.mubr.f32.mxu0 0.0
        %795 = vmatmul.mubr.f32.gmra.mrb[0].mxu0 %v716
        %v796 = vpop.f32.mrb[0].mxu0
        %v797 = vadd.f32 %v699, %v796
        %v798 = vpop.f32.mrb[0].mxu0
        %v799 = vadd.f32 %v699, %v798
        %800 = vmatprep.mubr.f32.mxu0 0.0
        %801 = vmatmul.mubr.f32.gmra.mrb[0].mxu0 %v719
        %v802 = vpop.f32.mrb[0].mxu0
        %v803 = vadd.f32 %v704, %v802
        %v804 = vpop.f32.mrb[0].mxu0
        %v805 = vadd.f32 %v704, %v804
        %806 = vmatprep.mubr.f32.mxu0 0.0
        %807 = vmatmul.mubr.f32.gmra.mrb[0].mxu0 %v722
        %v808 = vpop.f32.mrb[0].mxu0
        %v809 = vadd.f32 %v709, %v808
        %v810 = vpop.f32.mrb[0].mxu0
        %v811 = vadd.f32 %v709, %v810
        %812 = vdwg.mxu0
        %v813 = vmul.f32 %v791, 100.0
        %v814 = vmul.f32 %v793, 100.0
        %v815 = vmul.f32 %v797, 100.0
        %v816 = vmul.f32 %v799, 100.0
        %v817 = vmul.f32 %v803, 100.0
        %v818 = vmul.f32 %v805, 100.0
        %v819 = vmul.f32 %v809, 100.0
        %v820 = vmul.f32 %v811, 100.0
        %v821 = vmin.f32 %v813, 20.0
        %v822 = vmin.f32 %v814, 20.0
        %v823 = vmin.f32 %v815, 20.0
        %v824 = vmin.f32 %v816, 20.0
        %v825 = vmin.f32 %v817, 20.0
        %v826 = vmin.f32 %v818, 20.0
        %v827 = vmin.f32 %v819, 20.0
        %v828 = vmin.f32 %v820, 20.0
        %v829 = vmul.f32 %v821, 1.442695
        %v830 = vpow.pop %v829
        %v831 = vmul.f32 %v822, 1.442695
        %v832 = vpow.pop %v831
        %v833 = vmul.f32 %v823, 1.442695
        %v834 = vpow.pop %v833
        %v835 = vmul.f32 %v824, 1.442695
        %v836 = vpow.pop %v835
        %v837 = vmul.f32 %v825, 1.442695
        %v838 = vpow.pop %v837
        %v839 = vmul.f32 %v826, 1.442695
        %v840 = vpow.pop %v839
        %v841 = vmul.f32 %v827, 1.442695
        %v842 = vpow.pop %v841
        %v843 = vmul.f32 %v828, 1.442695
        %v844 = vpow.pop %v843
        %v845 = vadd.f32 %v830, 1.0
        %v846 = vlog2.pop %v845
        %v847 = vmul.f32 %v846, 0.6931472
        %v848 = vmul.f32 -0.5, %v830
        %v849 = vadd.f32 %v848, 1.0
        %v850 = vmul.f32 %v849, %v830
        %v851 = vand.u32 2147483647, %v830
        %vm852 = vcmp.lt.f32.partialorder %v851, 0.0004427343
        %v853 = vsel %vm852, %v850, %v847
        %v854 = vadd.f32 %v832, 1.0
        %v855 = vlog2.pop %v854
        %v856 = vmul.f32 %v855, 0.6931472
        %v857 = vmul.f32 -0.5, %v832
        %v858 = vadd.f32 %v857, 1.0
        %v859 = vmul.f32 %v858, %v832
        %v860 = vand.u32 2147483647, %v832
        %vm861 = vcmp.lt.f32.partialorder %v860, 0.0004427343
        %v862 = vsel %vm861, %v859, %v856
        %v863 = vadd.f32 %v834, 1.0
        %v864 = vlog2.pop %v863
        %v865 = vmul.f32 %v864, 0.6931472
        %v866 = vmul.f32 -0.5, %v834
        %v867 = vadd.f32 %v866, 1.0
        %v868 = vmul.f32 %v867, %v834
        %v869 = vand.u32 2147483647, %v834
        %vm870 = vcmp.lt.f32.partialorder %v869, 0.0004427343
        %v871 = vsel %vm870, %v868, %v865
        %v872 = vadd.f32 %v836, 1.0
        %v873 = vlog2.pop %v872
        %v874 = vmul.f32 %v873, 0.6931472
        %v875 = vmul.f32 -0.5, %v836
        %v876 = vadd.f32 %v875, 1.0
        %v877 = vmul.f32 %v876, %v836
        %v878 = vand.u32 2147483647, %v836
        %vm879 = vcmp.lt.f32.partialorder %v878, 0.0004427343
        %v880 = vsel %vm879, %v877, %v874
        %v881 = vadd.f32 %v838, 1.0
        %v882 = vlog2.pop %v881
        %v883 = vmul.f32 %v882, 0.6931472
        %v884 = vmul.f32 -0.5, %v838
        %v885 = vadd.f32 %v884, 1.0
        %v886 = vmul.f32 %v885, %v838
        %v887 = vand.u32 2147483647, %v838
        %vm888 = vcmp.lt.f32.partialorder %v887, 0.0004427343
        %v889 = vsel %vm888, %v886, %v883
        %v890 = vadd.f32 %v840, 1.0
        %v891 = vlog2.pop %v890
        %v892 = vmul.f32 %v891, 0.6931472
        %v893 = vmul.f32 -0.5, %v840
        %v894 = vadd.f32 %v893, 1.0
        %v895 = vmul.f32 %v894, %v840
        %v896 = vand.u32 2147483647, %v840
        %vm897 = vcmp.lt.f32.partialorder %v896, 0.0004427343
        %v898 = vsel %vm897, %v895, %v892
        %v899 = vadd.f32 %v842, 1.0
        %v900 = vlog2.pop %v899
        %v901 = vmul.f32 %v900, 0.6931472
        %v902 = vmul.f32 -0.5, %v842
        %v903 = vadd.f32 %v902, 1.0
        %v904 = vmul.f32 %v903, %v842
        %v905 = vand.u32 2147483647, %v842
        %vm906 = vcmp.lt.f32.partialorder %v905, 0.0004427343
        %v907 = vsel %vm906, %v904, %v901
        %v908 = vadd.f32 %v844, 1.0
        %v909 = vlog2.pop %v908
        %v910 = vmul.f32 %v909, 0.6931472
        %v911 = vmul.f32 -0.5, %v844
        %v912 = vadd.f32 %v911, 1.0
        %v913 = vmul.f32 %v912, %v844
        %v914 = vand.u32 2147483647, %v844
        %vm915 = vcmp.lt.f32.partialorder %v914, 0.0004427343
        %v916 = vsel %vm915, %v913, %v910
        %v917 = vmul.f32 %v853, 0.01
        %v918 = vmul.f32 %v862, 0.01
        %v919 = vmul.f32 %v871, 0.01
        %v920 = vmul.f32 %v880, 0.01
        %v921 = vmul.f32 %v889, 0.01
        %v922 = vmul.f32 %v898, 0.01
        %v923 = vmul.f32 %v907, 0.01
        %v924 = vmul.f32 %v916, 0.01
        %vm925 = vcmp.gt.f32.partialorder %v813, 20.0
        %vm926 = vcmp.gt.f32.partialorder %v814, 20.0
        %vm927 = vcmp.gt.f32.partialorder %v815, 20.0
        %vm928 = vcmp.gt.f32.partialorder %v816, 20.0
        %vm929 = vcmp.gt.f32.partialorder %v817, 20.0
        %vm930 = vcmp.gt.f32.partialorder %v818, 20.0
        %vm931 = vcmp.gt.f32.partialorder %v819, 20.0
        %vm932 = vcmp.gt.f32.partialorder %v820, 20.0
        %v933 = vsel %vm925, %v791, %v917
        %v934 = vsel %vm926, %v793, %v918
        %v935 = vsel %vm927, %v797, %v919
        %v936 = vsel %vm928, %v799, %v920
        %v937 = vsel %vm929, %v803, %v921
        %v938 = vsel %vm930, %v805, %v922
        %v939 = vsel %vm931, %v809, %v923
        %v940 = vsel %vm932, %v811, %v924
        %v941 = vld [vmem:[%s9] sm:$0xff]
        %v942 = vld [vmem:[%s9 + $0x8] sm:$0xff]
        %v943 = vld [vmem:[%s9 + $0x10] sm:$0xff]
        %v944 = vld [vmem:[%s9 + $0x18] sm:$0xff]
        %v945 = vld [vmem:[%s3] sm:$0xff]
        %v946 = vld [vmem:[%s3 + $0x8] sm:$0xff]
        %v947 = vld [vmem:[%s3 + $0x10] sm:$0xff]
        %v948 = vld [vmem:[%s3 + $0x18] sm:$0xff]
        %v949 = vld [vmem:[%s4] sm:$0xff]
        %v950 = vld [vmem:[%s4 + $0x8] sm:$0xff]
        %v951 = vld [vmem:[%s4 + $0x10] sm:$0xff]
        %v952 = vld [vmem:[%s4 + $0x18] sm:$0xff]
        %v954 = vsel %vm448, %v949, 0
        %v957 = vsel %vm448, %v950, 0
        %v960 = vsel %vm448, %v951, 0
        %v963 = vsel %vm448, %v952, 0
        %965 = vmatprep.subr.mxu0 %v464
        %966 = vmatpush1.msra.mxu0 %v462
        %967 = vmatprep.subr.mxu0 0.0
        %968 = vmatpush1.msra.mxu0 0.0
        %969 = vmatprep.subr.mxu0 0.0
        %970 = vmatpush1.msra.mxu0 0.0
        %971 = vmatprep.subr.mxu0 0.0
        %972 = vmatpush1.msra.mxu0 0.0
        %973 = vmatprep.subr.mxu0 0.0
        %974 = vmatpush1.msra.mxu0 0.0
        %975 = vmatprep.subr.mxu0 0.0
        %976 = vmatpush1.msra.mxu0 0.0
        %977 = vmatprep.subr.mxu0 0.0
        %978 = vmatpush1.msra.mxu0 0.0
        %979 = vmatprep.subr.mxu0 0.0
        %980 = vmatpush1.msra.mxu0 0.0
        %981 = vmatprep.subr.mxu0 0.0
        %982 = vmatpush1.msra.mxu0 0.0
        %983 = vmatprep.subr.mxu0 0.0
        %984 = vmatpush1.msra.mxu0 0.0
        %985 = vmatprep.subr.mxu0 0.0
        %986 = vmatpush1.msra.mxu0 0.0
        %987 = vmatprep.subr.mxu0 0.0
        %988 = vmatpush1.msra.mxu0 0.0
        %989 = vmatprep.subr.mxu0 0.0
        %990 = vmatpush1.msra.mxu0 0.0
        %991 = vmatprep.subr.mxu0 0.0
        %992 = vmatpush1.msra.mxu0 0.0
        %993 = vmatprep.subr.mxu0 0.0
        %994 = vmatpush1.msra.mxu0 0.0
        %995 = vmatprep.subr.mxu0 0.0
        %996 = vmatpush1.msra.mxu0 0.0
        %997 = vmatprep.subr.mxu0 0.0
        %998 = vmatpush1.msra.mxu0 0.0
        %999 = vmatprep.subr.mxu0 0.0
        %1000 = vmatpush1.msra.mxu0 0.0
        %1001 = vmatprep.subr.mxu0 0.0
        %1002 = vmatpush1.msra.mxu0 0.0
        %1003 = vmatprep.subr.mxu0 0.0
        %1004 = vmatpush1.msra.mxu0 0.0
        %1005 = vmatprep.subr.mxu0 0.0
        %1006 = vmatpush1.msra.mxu0 0.0
        %1007 = vmatprep.subr.mxu0 0.0
        %1008 = vmatpush1.msra.mxu0 0.0
        %1009 = vmatprep.subr.mxu0 0.0
        %1010 = vmatpush1.msra.mxu0 0.0
        %1011 = vmatprep.subr.mxu0 0.0
        %1012 = vmatpush1.msra.mxu0 0.0
        %1013 = vmatprep.subr.mxu0 0.0
        %1014 = vmatpush1.msra.mxu0 0.0
        %1015 = vmatprep.subr.mxu0 0.0
        %1016 = vmatpush1.msra.mxu0 0.0
        %1017 = vmatprep.subr.mxu0 0.0
        %1018 = vmatpush1.msra.mxu0 0.0
        %1019 = vmatprep.subr.mxu0 0.0
        %1020 = vmatpush1.msra.mxu0 0.0
        %1021 = vmatprep.subr.mxu0 0.0
        %1022 = vmatpush1.msra.mxu0 0.0
        %1023 = vmatprep.subr.mxu0 0.0
        %1024 = vmatpush1.msra.mxu0 0.0
        %1025 = vmatprep.subr.mxu0 0.0
        %1026 = vmatpush1.msra.mxu0 0.0
        %1027 = vmatprep.subr.mxu0 0.0
        %1028 = vmatpush1.msra.mxu0 0.0
        %1029 = vmatprep.mubr.f32.mxu0 0.0
        %1030 = vmatmul.mubr.f32.gmra.mrb[0].mxu0 %v954
        %v1031 = vpop.f32.mrb[0].mxu0
        %v1032 = vadd.f32 0.0, %v1031
        %v1033 = vpop.f32.mrb[0].mxu0
        %v1034 = vadd.f32 0.0, %v1033
        %1035 = vmatprep.mubr.f32.mxu0 0.0
        %1036 = vmatmul.mubr.f32.gmra.mrb[0].mxu0 %v957
        %v1037 = vpop.f32.mrb[0].mxu0
        %v1038 = vadd.f32 0.0, %v1037
        %v1039 = vpop.f32.mrb[0].mxu0
        %v1040 = vadd.f32 0.0, %v1039
        %1041 = vmatprep.mubr.f32.mxu0 0.0
        %1042 = vmatmul.mubr.f32.gmra.mrb[0].mxu0 %v960
        %v1043 = vpop.f32.mrb[0].mxu0
        %v1044 = vadd.f32 0.0, %v1043
        %v1045 = vpop.f32.mrb[0].mxu0
        %v1046 = vadd.f32 0.0, %v1045
        %1047 = vmatprep.mubr.f32.mxu0 0.0
        %1048 = vmatmul.mubr.f32.gmra.mrb[0].mxu0 %v963
        %v1049 = vpop.f32.mrb[0].mxu0
        %v1050 = vadd.f32 0.0, %v1049
        %v1051 = vpop.f32.mrb[0].mxu0
        %v1052 = vadd.f32 0.0, %v1051
        %1053 = vdwg.mxu0
        %vm1054 = vcmask 236544
        %v1056 = vsel %vm1054, %v945, 0
        %v1059 = vsel %vm1054, %v946, 0
        %v1062 = vsel %vm1054, %v947, 0
        %v1065 = vsel %vm1054, %v948, 0
        %vm1067 = vcmask 1044480
        %v1069 = vsel %vm1067, %v939, 0
        %v1072 = vsel %vm1067, %v940, 0
        %1074 = vmatprep.subr.mxu0 %v934
        %1075 = vmatpush1.msra.mxu0 %v933
        %1076 = vmatprep.subr.mxu0 %v936
        %1077 = vmatpush1.msra.mxu0 %v935
        %1078 = vmatprep.subr.mxu0 %v938
        %1079 = vmatpush1.msra.mxu0 %v937
        %1080 = vmatprep.subr.mxu0 %v1072
        %1081 = vmatpush1.msra.mxu0 %v1069
        %1082 = vmatprep.subr.mxu0 0.0
        %1083 = vmatpush1.msra.mxu0 0.0
        %1084 = vmatprep.subr.mxu0 0.0
        %1085 = vmatpush1.msra.mxu0 0.0
        %1086 = vmatprep.subr.mxu0 0.0
        %1087 = vmatpush1.msra.mxu0 0.0
        %1088 = vmatprep.subr.mxu0 0.0
        %1089 = vmatpush1.msra.mxu0 0.0
        %1090 = vmatprep.subr.mxu0 0.0
        %1091 = vmatpush1.msra.mxu0 0.0
        %1092 = vmatprep.subr.mxu0 0.0
        %1093 = vmatpush1.msra.mxu0 0.0
        %1094 = vmatprep.subr.mxu0 0.0
        %1095 = vmatpush1.msra.mxu0 0.0
        %1096 = vmatprep.subr.mxu0 0.0
        %1097 = vmatpush1.msra.mxu0 0.0
        %1098 = vmatprep.subr.mxu0 0.0
        %1099 = vmatpush1.msra.mxu0 0.0
        %1100 = vmatprep.subr.mxu0 0.0
        %1101 = vmatpush1.msra.mxu0 0.0
        %1102 = vmatprep.subr.mxu0 0.0
        %1103 = vmatpush1.msra.mxu0 0.0
        %1104 = vmatprep.subr.mxu0 0.0
        %1105 = vmatpush1.msra.mxu0 0.0
        %1106 = vmatprep.subr.mxu0 0.0
        %1107 = vmatpush1.msra.mxu0 0.0
        %1108 = vmatprep.subr.mxu0 0.0
        %1109 = vmatpush1.msra.mxu0 0.0
        %1110 = vmatprep.subr.mxu0 0.0
        %1111 = vmatpush1.msra.mxu0 0.0
        %1112 = vmatprep.subr.mxu0 0.0
        %1113 = vmatpush1.msra.mxu0 0.0
        %1114 = vmatprep.subr.mxu0 0.0
        %1115 = vmatpush1.msra.mxu0 0.0
        %1116 = vmatprep.subr.mxu0 0.0
        %1117 = vmatpush1.msra.mxu0 0.0
        %1118 = vmatprep.subr.mxu0 0.0
        %1119 = vmatpush1.msra.mxu0 0.0
        %1120 = vmatprep.subr.mxu0 0.0
        %1121 = vmatpush1.msra.mxu0 0.0
        %1122 = vmatprep.subr.mxu0 0.0
        %1123 = vmatpush1.msra.mxu0 0.0
        %1124 = vmatprep.subr.mxu0 0.0
        %1125 = vmatpush1.msra.mxu0 0.0
        %1126 = vmatprep.subr.mxu0 0.0
        %1127 = vmatpush1.msra.mxu0 0.0
        %1128 = vmatprep.subr.mxu0 0.0
        %1129 = vmatpush1.msra.mxu0 0.0
        %1130 = vmatprep.subr.mxu0 0.0
        %1131 = vmatpush1.msra.mxu0 0.0
        %1132 = vmatprep.subr.mxu0 0.0
        %1133 = vmatpush1.msra.mxu0 0.0
        %1134 = vmatprep.subr.mxu0 0.0
        %1135 = vmatpush1.msra.mxu0 0.0
        %1136 = vmatprep.subr.mxu0 0.0
        %1137 = vmatpush1.msra.mxu0 0.0
        %1138 = vmatprep.mubr.f32.mxu0 0.0
        %1139 = vmatmul.mubr.f32.gmra.mrb[0].mxu0 %v1056
        %v1140 = vpop.f32.mrb[0].mxu0
        %v1141 = vadd.f32 %v1032, %v1140
        %v1142 = vpop.f32.mrb[0].mxu0
        %v1143 = vadd.f32 %v1034, %v1142
        %1144 = vmatprep.mubr.f32.mxu0 0.0
        %1145 = vmatmul.mubr.f32.gmra.mrb[0].mxu0 %v1059
        %v1146 = vpop.f32.mrb[0].mxu0
        %v1147 = vadd.f32 %v1038, %v1146
        %v1148 = vpop.f32.mrb[0].mxu0
        %v1149 = vadd.f32 %v1040, %v1148
        %1150 = vmatprep.mubr.f32.mxu0 0.0
        %1151 = vmatmul.mubr.f32.gmra.mrb[0].mxu0 %v1062
        %v1152 = vpop.f32.mrb[0].mxu0
        %v1153 = vadd.f32 %v1044, %v1152
        %v1154 = vpop.f32.mrb[0].mxu0
        %v1155 = vadd.f32 %v1046, %v1154
        %1156 = vmatprep.mubr.f32.mxu0 0.0
        %1157 = vmatmul.mubr.f32.gmra.mrb[0].mxu0 %v1065
        %v1158 = vpop.f32.mrb[0].mxu0
        %v1159 = vadd.f32 %v1050, %v1158
        %v1160 = vpop.f32.mrb[0].mxu0
        %v1161 = vadd.f32 %v1052, %v1160
        %1162 = vdwg.mxu0
        %1164 = vset.pattern.permute.xlu0 0
        %1165 = vperm.xlu0 %1164, %v941
        %v1166 = vpop.permute.xlu0 %1165
        %1169 = vset.pattern.permute.xlu0 0
        %1170 = vperm.xlu0 %1169, %v942
        %v1171 = vpop.permute.xlu0 %1170
        %1174 = vset.pattern.permute.xlu0 0
        %1175 = vperm.xlu0 %1174, %v943
        %v1176 = vpop.permute.xlu0 %1175
        %1179 = vset.pattern.permute.xlu0 0
        %1180 = vperm.xlu0 %1179, %v944
        %v1181 = vpop.permute.xlu0 %1180
        %v1183 = vadd.f32 %v1141, %v1166
        %v1184 = vadd.f32 %v1143, %v1166
        %v1185 = vadd.f32 %v1147, %v1171
        %v1186 = vadd.f32 %v1149, %v1171
        %v1187 = vadd.f32 %v1153, %v1176
        %v1188 = vadd.f32 %v1155, %v1176
        %v1189 = vadd.f32 %v1159, %v1181
        %v1190 = vadd.f32 %v1161, %v1181
        %v1191 = vmul.f32 %v1183, 100.0
        %v1192 = vmul.f32 %v1184, 100.0
        %v1193 = vmul.f32 %v1185, 100.0
        %v1194 = vmul.f32 %v1186, 100.0
        %v1195 = vmul.f32 %v1187, 100.0
        %v1196 = vmul.f32 %v1188, 100.0
        %v1197 = vmul.f32 %v1189, 100.0
        %v1198 = vmul.f32 %v1190, 100.0
        %v1199 = vmin.f32 %v1191, 20.0
        %v1200 = vmin.f32 %v1192, 20.0
        %v1201 = vmin.f32 %v1193, 20.0
        %v1202 = vmin.f32 %v1194, 20.0
        %v1203 = vmin.f32 %v1195, 20.0
        %v1204 = vmin.f32 %v1196, 20.0
        %v1205 = vmin.f32 %v1197, 20.0
        %v1206 = vmin.f32 %v1198, 20.0
        %v1207 = vmul.f32 %v1199, 1.442695
        %v1208 = vpow.pop %v1207
        %v1209 = vmul.f32 %v1200, 1.442695
        %v1210 = vpow.pop %v1209
        %v1211 = vmul.f32 %v1201, 1.442695
        %v1212 = vpow.pop %v1211
        %v1213 = vmul.f32 %v1202, 1.442695
        %v1214 = vpow.pop %v1213
        %v1215 = vmul.f32 %v1203, 1.442695
        %v1216 = vpow.pop %v1215
        %v1217 = vmul.f32 %v1204, 1.442695
        %v1218 = vpow.pop %v1217
        %v1219 = vmul.f32 %v1205, 1.442695
        %v1220 = vpow.pop %v1219
        %v1221 = vmul.f32 %v1206, 1.442695
        %v1222 = vpow.pop %v1221
        %v1223 = vadd.f32 %v1208, 1.0
        %v1224 = vlog2.pop %v1223
        %v1225 = vmul.f32 %v1224, 0.6931472
        %v1226 = vmul.f32 -0.5, %v1208
        %v1227 = vadd.f32 %v1226, 1.0
        %v1228 = vmul.f32 %v1227, %v1208
        %v1229 = vand.u32 2147483647, %v1208
        %vm1230 = vcmp.lt.f32.partialorder %v1229, 0.0004427343
        %v1231 = vsel %vm1230, %v1228, %v1225
        %v1232 = vadd.f32 %v1210, 1.0
        %v1233 = vlog2.pop %v1232
        %v1234 = vmul.f32 %v1233, 0.6931472
        %v1235 = vmul.f32 -0.5, %v1210
        %v1236 = vadd.f32 %v1235, 1.0
        %v1237 = vmul.f32 %v1236, %v1210
        %v1238 = vand.u32 2147483647, %v1210
        %vm1239 = vcmp.lt.f32.partialorder %v1238, 0.0004427343
        %v1240 = vsel %vm1239, %v1237, %v1234
        %v1241 = vadd.f32 %v1212, 1.0
        %v1242 = vlog2.pop %v1241
        %v1243 = vmul.f32 %v1242, 0.6931472
        %v1244 = vmul.f32 -0.5, %v1212
        %v1245 = vadd.f32 %v1244, 1.0
        %v1246 = vmul.f32 %v1245, %v1212
        %v1247 = vand.u32 2147483647, %v1212
        %vm1248 = vcmp.lt.f32.partialorder %v1247, 0.0004427343
        %v1249 = vsel %vm1248, %v1246, %v1243
        %v1250 = vadd.f32 %v1214, 1.0
        %v1251 = vlog2.pop %v1250
        %v1252 = vmul.f32 %v1251, 0.6931472
        %v1253 = vmul.f32 -0.5, %v1214
        %v1254 = vadd.f32 %v1253, 1.0
        %v1255 = vmul.f32 %v1254, %v1214
        %v1256 = vand.u32 2147483647, %v1214
        %vm1257 = vcmp.lt.f32.partialorder %v1256, 0.0004427343
        %v1258 = vsel %vm1257, %v1255, %v1252
        %v1259 = vadd.f32 %v1216, 1.0
        %v1260 = vlog2.pop %v1259
        %v1261 = vmul.f32 %v1260, 0.6931472
        %v1262 = vmul.f32 -0.5, %v1216
        %v1263 = vadd.f32 %v1262, 1.0
        %v1264 = vmul.f32 %v1263, %v1216
        %v1265 = vand.u32 2147483647, %v1216
        %vm1266 = vcmp.lt.f32.partialorder %v1265, 0.0004427343
        %v1267 = vsel %vm1266, %v1264, %v1261
        %v1268 = vadd.f32 %v1218, 1.0
        %v1269 = vlog2.pop %v1268
        %v1270 = vmul.f32 %v1269, 0.6931472
        %v1271 = vmul.f32 -0.5, %v1218
        %v1272 = vadd.f32 %v1271, 1.0
        %v1273 = vmul.f32 %v1272, %v1218
        %v1274 = vand.u32 2147483647, %v1218
        %vm1275 = vcmp.lt.f32.partialorder %v1274, 0.0004427343
        %v1276 = vsel %vm1275, %v1273, %v1270
        %v1277 = vadd.f32 %v1220, 1.0
        %v1278 = vlog2.pop %v1277
        %v1279 = vmul.f32 %v1278, 0.6931472
        %v1280 = vmul.f32 -0.5, %v1220
        %v1281 = vadd.f32 %v1280, 1.0
        %v1282 = vmul.f32 %v1281, %v1220
        %v1283 = vand.u32 2147483647, %v1220
        %vm1284 = vcmp.lt.f32.partialorder %v1283, 0.0004427343
        %v1285 = vsel %vm1284, %v1282, %v1279
        %v1286 = vadd.f32 %v1222, 1.0
        %v1287 = vlog2.pop %v1286
        %v1288 = vmul.f32 %v1287, 0.6931472
        %v1289 = vmul.f32 -0.5, %v1222
        %v1290 = vadd.f32 %v1289, 1.0
        %v1291 = vmul.f32 %v1290, %v1222
        %v1292 = vand.u32 2147483647, %v1222
        %vm1293 = vcmp.lt.f32.partialorder %v1292, 0.0004427343
        %v1294 = vsel %vm1293, %v1291, %v1288
        %v1295 = vmul.f32 %v1231, 0.01
        %v1296 = vmul.f32 %v1240, 0.01
        %v1297 = vmul.f32 %v1249, 0.01
        %v1298 = vmul.f32 %v1258, 0.01
        %v1299 = vmul.f32 %v1267, 0.01
        %v1300 = vmul.f32 %v1276, 0.01
        %v1301 = vmul.f32 %v1285, 0.01
        %v1302 = vmul.f32 %v1294, 0.01
        %vm1303 = vcmp.gt.f32.partialorder %v1191, 20.0
        %vm1304 = vcmp.gt.f32.partialorder %v1192, 20.0
        %vm1305 = vcmp.gt.f32.partialorder %v1193, 20.0
        %vm1306 = vcmp.gt.f32.partialorder %v1194, 20.0
        %vm1307 = vcmp.gt.f32.partialorder %v1195, 20.0
        %vm1308 = vcmp.gt.f32.partialorder %v1196, 20.0
        %vm1309 = vcmp.gt.f32.partialorder %v1197, 20.0
        %vm1310 = vcmp.gt.f32.partialorder %v1198, 20.0
        %v1311 = vsel %vm1303, %v1183, %v1295
        %v1312 = vsel %vm1304, %v1184, %v1296
        %v1313 = vsel %vm1305, %v1185, %v1297
        %v1314 = vsel %vm1306, %v1186, %v1298
        %v1315 = vsel %vm1307, %v1187, %v1299
        %v1316 = vsel %vm1308, %v1188, %v1300
        %v1317 = vsel %vm1309, %v1189, %v1301
        %v1318 = vsel %vm1310, %v1190, %v1302
        %v1319 = vld [vmem:[%s10] sm:$0xff]
        %v1320 = vld [vmem:[%s10 + $0x8] sm:$0xff]
        %v1321 = vld [vmem:[%s10 + $0x10] sm:$0xff]
        %v1322 = vld [vmem:[%s10 + $0x18] sm:$0xff]
        %v1323 = vld [vmem:[%s5] sm:$0xff]
        %v1324 = vld [vmem:[%s5 + $0x8] sm:$0xff]
        %v1325 = vld [vmem:[%s5 + $0x10] sm:$0xff]
        %v1326 = vld [vmem:[%s5 + $0x18] sm:$0xff]
        %1328 = vset.pattern.permute.xlu0 0
        %1329 = vperm.xlu0 %1328, %v1319
        %v1330 = vpop.permute.xlu0 %1329
        %1333 = vset.pattern.permute.xlu0 0
        %1334 = vperm.xlu0 %1333, %v1320
        %v1335 = vpop.permute.xlu0 %1334
        %1338 = vset.pattern.permute.xlu0 0
        %1339 = vperm.xlu0 %1338, %v1321
        %v1340 = vpop.permute.xlu0 %1339
        %1343 = vset.pattern.permute.xlu0 0
        %1344 = vperm.xlu0 %1343, %v1322
        %v1345 = vpop.permute.xlu0 %1344
        %v1348 = vsel %vm711, %v1323, 0
        %v1351 = vsel %vm711, %v1324, 0
        %v1354 = vsel %vm711, %v1325, 0
        %v1357 = vsel %vm711, %v1326, 0
        %1359 = vmatprep.subr.mxu0 %v1312
        %1360 = vmatpush1.msra.mxu0 %v1311
        %1361 = vmatprep.subr.mxu0 %v1314
        %1362 = vmatpush1.msra.mxu0 %v1313
        %1363 = vmatprep.subr.mxu0 %v1316
        %1364 = vmatpush1.msra.mxu0 %v1315
        %1365 = vmatprep.subr.mxu0 %v1318
        %1366 = vmatpush1.msra.mxu0 %v1317
        %1367 = vmatprep.subr.mxu0 0.0
        %1368 = vmatpush1.msra.mxu0 0.0
        %1369 = vmatprep.subr.mxu0 0.0
        %1370 = vmatpush1.msra.mxu0 0.0
        %1371 = vmatprep.subr.mxu0 0.0
        %1372 = vmatpush1.msra.mxu0 0.0
        %1373 = vmatprep.subr.mxu0 0.0
        %1374 = vmatpush1.msra.mxu0 0.0
        %1375 = vmatprep.subr.mxu0 0.0
        %1376 = vmatpush1.msra.mxu0 0.0
        %1377 = vmatprep.subr.mxu0 0.0
        %1378 = vmatpush1.msra.mxu0 0.0
        %1379 = vmatprep.subr.mxu0 0.0
        %1380 = vmatpush1.msra.mxu0 0.0
        %1381 = vmatprep.subr.mxu0 0.0
        %1382 = vmatpush1.msra.mxu0 0.0
        %1383 = vmatprep.subr.mxu0 0.0
        %1384 = vmatpush1.msra.mxu0 0.0
        %1385 = vmatprep.subr.mxu0 0.0
        %1386 = vmatpush1.msra.mxu0 0.0
        %1387 = vmatprep.subr.mxu0 0.0
        %1388 = vmatpush1.msra.mxu0 0.0
        %1389 = vmatprep.subr.mxu0 0.0
        %1390 = vmatpush1.msra.mxu0 0.0
        %1391 = vmatprep.subr.mxu0 0.0
        %1392 = vmatpush1.msra.mxu0 0.0
        %1393 = vmatprep.subr.mxu0 0.0
        %1394 = vmatpush1.msra.mxu0 0.0
        %1395 = vmatprep.subr.mxu0 0.0
        %1396 = vmatpush1.msra.mxu0 0.0
        %1397 = vmatprep.subr.mxu0 0.0
        %1398 = vmatpush1.msra.mxu0 0.0
        %1399 = vmatprep.subr.mxu0 0.0
        %1400 = vmatpush1.msra.mxu0 0.0
        %1401 = vmatprep.subr.mxu0 0.0
        %1402 = vmatpush1.msra.mxu0 0.0
        %1403 = vmatprep.subr.mxu0 0.0
        %1404 = vmatpush1.msra.mxu0 0.0
        %1405 = vmatprep.subr.mxu0 0.0
        %1406 = vmatpush1.msra.mxu0 0.0
        %1407 = vmatprep.subr.mxu0 0.0
        %1408 = vmatpush1.msra.mxu0 0.0
        %1409 = vmatprep.subr.mxu0 0.0
        %1410 = vmatpush1.msra.mxu0 0.0
        %1411 = vmatprep.subr.mxu0 0.0
        %1412 = vmatpush1.msra.mxu0 0.0
        %1413 = vmatprep.subr.mxu0 0.0
        %1414 = vmatpush1.msra.mxu0 0.0
        %1415 = vmatprep.subr.mxu0 0.0
        %1416 = vmatpush1.msra.mxu0 0.0
        %1417 = vmatprep.subr.mxu0 0.0
        %1418 = vmatpush1.msra.mxu0 0.0
        %1419 = vmatprep.subr.mxu0 0.0
        %1420 = vmatpush1.msra.mxu0 0.0
        %1421 = vmatprep.subr.mxu0 0.0
        %1422 = vmatpush1.msra.mxu0 0.0
        %1423 = vmatprep.mubr.f32.mxu0 0.0
        %1424 = vmatmul.mubr.f32.gmra.mrb[0].mxu0 %v1348
        %v1425 = vpop.f32.mrb[0].mxu0
        %v1426 = vadd.f32 %v1330, %v1425
        %v1427 = vpop.f32.mrb[0].mxu0
        %v1428 = vadd.f32 %v1330, %v1427
        %1429 = vmatprep.mubr.f32.mxu0 0.0
        %1430 = vmatmul.mubr.f32.gmra.mrb[0].mxu0 %v1351
        %v1431 = vpop.f32.mrb[0].mxu0
        %v1432 = vadd.f32 %v1335, %v1431
        %v1433 = vpop.f32.mrb[0].mxu0
        %v1434 = vadd.f32 %v1335, %v1433
        %1435 = vmatprep.mubr.f32.mxu0 0.0
        %1436 = vmatmul.mubr.f32.gmra.mrb[0].mxu0 %v1354
        %v1437 = vpop.f32.mrb[0].mxu0
        %v1438 = vadd.f32 %v1340, %v1437
        %v1439 = vpop.f32.mrb[0].mxu0
        %v1440 = vadd.f32 %v1340, %v1439
        %1441 = vmatprep.mubr.f32.mxu0 0.0
        %1442 = vmatmul.mubr.f32.gmra.mrb[0].mxu0 %v1357
        %v1443 = vpop.f32.mrb[0].mxu0
        %v1444 = vadd.f32 %v1345, %v1443
        %v1445 = vpop.f32.mrb[0].mxu0
        %v1446 = vadd.f32 %v1345, %v1445
        %1447 = vdwg.mxu0
        %v1448 = vmul.f32 %v1426, 100.0
        %v1449 = vmul.f32 %v1428, 100.0
        %v1450 = vmul.f32 %v1432, 100.0
        %v1451 = vmul.f32 %v1434, 100.0
        %v1452 = vmul.f32 %v1438, 100.0
        %v1453 = vmul.f32 %v1440, 100.0
        %v1454 = vmul.f32 %v1444, 100.0
        %v1455 = vmul.f32 %v1446, 100.0
        %v1456 = vmin.f32 %v1448, 20.0
        %v1457 = vmin.f32 %v1449, 20.0
        %v1458 = vmin.f32 %v1450, 20.0
        %v1459 = vmin.f32 %v1451, 20.0
        %v1460 = vmin.f32 %v1452, 20.0
        %v1461 = vmin.f32 %v1453, 20.0
        %v1462 = vmin.f32 %v1454, 20.0
        %v1463 = vmin.f32 %v1455, 20.0
        %v1464 = vmul.f32 %v1456, 1.442695
        %v1465 = vpow.pop %v1464
        %v1466 = vmul.f32 %v1457, 1.442695
        %v1467 = vpow.pop %v1466
        %v1468 = vmul.f32 %v1458, 1.442695
        %v1469 = vpow.pop %v1468
        %v1470 = vmul.f32 %v1459, 1.442695
        %v1471 = vpow.pop %v1470
        %v1472 = vmul.f32 %v1460, 1.442695
        %v1473 = vpow.pop %v1472
        %v1474 = vmul.f32 %v1461, 1.442695
        %v1475 = vpow.pop %v1474
        %v1476 = vmul.f32 %v1462, 1.442695
        %v1477 = vpow.pop %v1476
        %v1478 = vmul.f32 %v1463, 1.442695
        %v1479 = vpow.pop %v1478
        %v1480 = vadd.f32 %v1465, 1.0
        %v1481 = vlog2.pop %v1480
        %v1482 = vmul.f32 %v1481, 0.6931472
        %v1483 = vmul.f32 -0.5, %v1465
        %v1484 = vadd.f32 %v1483, 1.0
        %v1485 = vmul.f32 %v1484, %v1465
        %v1486 = vand.u32 2147483647, %v1465
        %vm1487 = vcmp.lt.f32.partialorder %v1486, 0.0004427343
        %v1488 = vsel %vm1487, %v1485, %v1482
        %v1489 = vadd.f32 %v1467, 1.0
        %v1490 = vlog2.pop %v1489
        %v1491 = vmul.f32 %v1490, 0.6931472
        %v1492 = vmul.f32 -0.5, %v1467
        %v1493 = vadd.f32 %v1492, 1.0
        %v1494 = vmul.f32 %v1493, %v1467
        %v1495 = vand.u32 2147483647, %v1467
        %vm1496 = vcmp.lt.f32.partialorder %v1495, 0.0004427343
        %v1497 = vsel %vm1496, %v1494, %v1491
        %v1498 = vadd.f32 %v1469, 1.0
        %v1499 = vlog2.pop %v1498
        %v1500 = vmul.f32 %v1499, 0.6931472
        %v1501 = vmul.f32 -0.5, %v1469
        %v1502 = vadd.f32 %v1501, 1.0
        %v1503 = vmul.f32 %v1502, %v1469
        %v1504 = vand.u32 2147483647, %v1469
        %vm1505 = vcmp.lt.f32.partialorder %v1504, 0.0004427343
        %v1506 = vsel %vm1505, %v1503, %v1500
        %v1507 = vadd.f32 %v1471, 1.0
        %v1508 = vlog2.pop %v1507
        %v1509 = vmul.f32 %v1508, 0.6931472
        %v1510 = vmul.f32 -0.5, %v1471
        %v1511 = vadd.f32 %v1510, 1.0
        %v1512 = vmul.f32 %v1511, %v1471
        %v1513 = vand.u32 2147483647, %v1471
        %vm1514 = vcmp.lt.f32.partialorder %v1513, 0.0004427343
        %v1515 = vsel %vm1514, %v1512, %v1509
        %v1516 = vadd.f32 %v1473, 1.0
        %v1517 = vlog2.pop %v1516
        %v1518 = vmul.f32 %v1517, 0.6931472
        %v1519 = vmul.f32 -0.5, %v1473
        %v1520 = vadd.f32 %v1519, 1.0
        %v1521 = vmul.f32 %v1520, %v1473
        %v1522 = vand.u32 2147483647, %v1473
        %vm1523 = vcmp.lt.f32.partialorder %v1522, 0.0004427343
        %v1524 = vsel %vm1523, %v1521, %v1518
        %v1525 = vadd.f32 %v1475, 1.0
        %v1526 = vlog2.pop %v1525
        %v1527 = vmul.f32 %v1526, 0.6931472
        %v1528 = vmul.f32 -0.5, %v1475
        %v1529 = vadd.f32 %v1528, 1.0
        %v1530 = vmul.f32 %v1529, %v1475
        %v1531 = vand.u32 2147483647, %v1475
        %vm1532 = vcmp.lt.f32.partialorder %v1531, 0.0004427343
        %v1533 = vsel %vm1532, %v1530, %v1527
        %v1534 = vadd.f32 %v1477, 1.0
        %v1535 = vlog2.pop %v1534
        %v1536 = vmul.f32 %v1535, 0.6931472
        %v1537 = vmul.f32 -0.5, %v1477
        %v1538 = vadd.f32 %v1537, 1.0
        %v1539 = vmul.f32 %v1538, %v1477
        %v1540 = vand.u32 2147483647, %v1477
        %vm1541 = vcmp.lt.f32.partialorder %v1540, 0.0004427343
        %v1542 = vsel %vm1541, %v1539, %v1536
        %v1543 = vadd.f32 %v1479, 1.0
        %v1544 = vlog2.pop %v1543
        %v1545 = vmul.f32 %v1544, 0.6931472
        %v1546 = vmul.f32 -0.5, %v1479
        %v1547 = vadd.f32 %v1546, 1.0
        %v1548 = vmul.f32 %v1547, %v1479
        %v1549 = vand.u32 2147483647, %v1479
        %vm1550 = vcmp.lt.f32.partialorder %v1549, 0.0004427343
        %v1551 = vsel %vm1550, %v1548, %v1545
        %v1552 = vmul.f32 %v1488, 0.01
        %v1553 = vmul.f32 %v1497, 0.01
        %v1554 = vmul.f32 %v1506, 0.01
        %v1555 = vmul.f32 %v1515, 0.01
        %v1556 = vmul.f32 %v1524, 0.01
        %v1557 = vmul.f32 %v1533, 0.01
        %v1558 = vmul.f32 %v1542, 0.01
        %v1559 = vmul.f32 %v1551, 0.01
        %vm1560 = vcmp.gt.f32.partialorder %v1448, 20.0
        %vm1561 = vcmp.gt.f32.partialorder %v1449, 20.0
        %vm1562 = vcmp.gt.f32.partialorder %v1450, 20.0
        %vm1563 = vcmp.gt.f32.partialorder %v1451, 20.0
        %vm1564 = vcmp.gt.f32.partialorder %v1452, 20.0
        %vm1565 = vcmp.gt.f32.partialorder %v1453, 20.0
        %vm1566 = vcmp.gt.f32.partialorder %v1454, 20.0
        %vm1567 = vcmp.gt.f32.partialorder %v1455, 20.0
        %v1568 = vsel %vm1560, %v1426, %v1552
        %v1569 = vsel %vm1561, %v1428, %v1553
        %v1570 = vsel %vm1562, %v1432, %v1554
        %v1571 = vsel %vm1563, %v1434, %v1555
        %v1572 = vsel %vm1564, %v1438, %v1556
        %v1573 = vsel %vm1565, %v1440, %v1557
        %v1574 = vsel %vm1566, %v1444, %v1558
        %v1575 = vsel %vm1567, %v1446, %v1559
        %v1576 = vld [vmem:[#allocation2] sm:$0x1]
        %v1577 = vld [vmem:[%s6] sm:$0x1]
        %1579 = vset.pattern.permute.xlu0 0
        %1580 = vperm.xlu0 %1579, %v1576
        %v1581 = vpop.permute.xlu0 %1580
        %v1583 = vlaneseq
        %v1584 = vshrl.u32 %v1583, 7
        %v1585 = vsub.s32 0, %v1584
        %v1586 = vrot.slane %v1581, %v1585
        %v1588 = vsel %vm711, %v1577, 0
        %1590 = vmatprep.subr.mxu0 %v1569
        %1591 = vmatpush1.msra.mxu0 %v1568
        %1592 = vmatprep.subr.mxu0 %v1571
        %1593 = vmatpush1.msra.mxu0 %v1570
        %1594 = vmatprep.subr.mxu0 %v1573
        %1595 = vmatpush1.msra.mxu0 %v1572
        %1596 = vmatprep.subr.mxu0 %v1575
        %1597 = vmatpush1.msra.mxu0 %v1574
        %1598 = vmatprep.subr.mxu0 0.0
        %1599 = vmatpush1.msra.mxu0 0.0
        %1600 = vmatprep.subr.mxu0 0.0
        %1601 = vmatpush1.msra.mxu0 0.0
        %1602 = vmatprep.subr.mxu0 0.0
        %1603 = vmatpush1.msra.mxu0 0.0
        %1604 = vmatprep.subr.mxu0 0.0
        %1605 = vmatpush1.msra.mxu0 0.0
        %1606 = vmatprep.subr.mxu0 0.0
        %1607 = vmatpush1.msra.mxu0 0.0
        %1608 = vmatprep.subr.mxu0 0.0
        %1609 = vmatpush1.msra.mxu0 0.0
        %1610 = vmatprep.subr.mxu0 0.0
        %1611 = vmatpush1.msra.mxu0 0.0
        %1612 = vmatprep.subr.mxu0 0.0
        %1613 = vmatpush1.msra.mxu0 0.0
        %1614 = vmatprep.subr.mxu0 0.0
        %1615 = vmatpush1.msra.mxu0 0.0
        %1616 = vmatprep.subr.mxu0 0.0
        %1617 = vmatpush1.msra.mxu0 0.0
        %1618 = vmatprep.subr.mxu0 0.0
        %1619 = vmatpush1.msra.mxu0 0.0
        %1620 = vmatprep.subr.mxu0 0.0
        %1621 = vmatpush1.msra.mxu0 0.0
        %1622 = vmatprep.subr.mxu0 0.0
        %1623 = vmatpush1.msra.mxu0 0.0
        %1624 = vmatprep.subr.mxu0 0.0
        %1625 = vmatpush1.msra.mxu0 0.0
        %1626 = vmatprep.subr.mxu0 0.0
        %1627 = vmatpush1.msra.mxu0 0.0
        %1628 = vmatprep.subr.mxu0 0.0
        %1629 = vmatpush1.msra.mxu0 0.0
        %1630 = vmatprep.subr.mxu0 0.0
        %1631 = vmatpush1.msra.mxu0 0.0
        %1632 = vmatprep.subr.mxu0 0.0
        %1633 = vmatpush1.msra.mxu0 0.0
        %1634 = vmatprep.subr.mxu0 0.0
        %1635 = vmatpush1.msra.mxu0 0.0
        %1636 = vmatprep.subr.mxu0 0.0
        %1637 = vmatpush1.msra.mxu0 0.0
        %1638 = vmatprep.subr.mxu0 0.0
        %1639 = vmatpush1.msra.mxu0 0.0
        %1640 = vmatprep.subr.mxu0 0.0
        %1641 = vmatpush1.msra.mxu0 0.0
        %1642 = vmatprep.subr.mxu0 0.0
        %1643 = vmatpush1.msra.mxu0 0.0
        %1644 = vmatprep.subr.mxu0 0.0
        %1645 = vmatpush1.msra.mxu0 0.0
        %1646 = vmatprep.subr.mxu0 0.0
        %1647 = vmatpush1.msra.mxu0 0.0
        %1648 = vmatprep.subr.mxu0 0.0
        %1649 = vmatpush1.msra.mxu0 0.0
        %1650 = vmatprep.subr.mxu0 0.0
        %1651 = vmatpush1.msra.mxu0 0.0
        %1652 = vmatprep.subr.mxu0 0.0
        %1653 = vmatpush1.msra.mxu0 0.0
        %1654 = vmatprep.mubr.f32.mxu0 0.0
        %1655 = vmatmul.mubr.f32.gmra.mrb[0].mxu0 %v1588
        %v1656 = vpop.f32.mrb[0].mxu0
        %v1657 = vadd.f32 %v1586, %v1656
        %v1658 = vpop.f32.mrb[0].mxu0
        %v1659 = vadd.f32 %v1586, %v1658
        %1660 = vdwg.mxu0
        %v1663 = vcombine.low %v1657, %v1659
        %v1665 = vunpack.c.l.s4 1966171168
        %v1666 = vunpack.c.0.s8 %v1665
        %v1667 = vlaneseq
        %v1668 = vshrl.u32 %v1667, 7
        %v1669 = vsub.s32 %v1666, %v1668
        %v1670 = vrot.slane %v1663, %v1669
        %v1672 = vunpack.c.l.s4 1966171168
        %v1673 = vunpack.c.0.s8 %v1672
        %v1674 = vlaneseq
        %v1675 = vshrl.u32 %v1674, 7
        %v1676 = vsub.s32 %v1673, %v1675
        %v1677 = vrot.slane %v1670, %v1676
        %v1679 = vlaneseq
        %vm1680 = vcmp.ge.s32.totalorder %v1679, 0
        %vm1681 = vcmp.lt.s32.totalorder %v1679, 256
        %vm1682 = vmand %vm1680, %vm1681
        %1683 = vst.msk [vmem:[%s409] sm:$0x3] %vm1682, %v1677
        %s1684 = sand.u32 %s293, 1
        %s1685 = scalar_lea.sflag [#allocation4], %s1684
        %s1686 = sand.u32 %s293, 1
        %s1687 = smul.addr %s1686, 2
        %s1688 = scalar_lea.vmem [#allocation3], %s1687
        // Predicated region
        $region69: #{tpu_custom_call.1} parent=67 // pred_check
          %p1689 = pneg %p303
        $region70: #{tpu_custom_call.1} parent=67 // pred_check_branch
          %1691 = sbr.rel (%p1689) target = $region72
        $region71: #{tpu_custom_call.1} parent=67 // pred_region
          %s1692 = smul.u32 2, %s28
          %s1694 = ssub.s32 32, 32
          %1695 = vsyncadd %s1685, %s1694
          %s1696 = smul.addr %s1692, 16
          %s1697 = scalar_lea.hbm %s12, %s1696
          %s1699 = sshll.u32 %s1688, 4
          %s1700 = int_to_ptr.vmem [resolvable:$true] %s1699
          %1702 = dma.vmem_to_hbm [thread:$0]  %s1700, 32, %s1697, %s1685
        $region72: #{tpu_custom_call.1} parent=67 // pred_fallthru
          _
      $region68: #{tpu_custom_call.1} parent=5 // pred_fallthru
        _
      %p1703 = scmp.le.s32.totalorder 2, %s23
      // Predicated region
      $region73: #{tpu_custom_call.1} parent=5 // pred_check
        %p1704 = pneg %p1703
      $region74: #{tpu_custom_call.1} parent=5 // pred_check_branch
        %1706 = sbr.rel (%p1704) target = $region76
      $region75: #{tpu_custom_call.1} parent=5 // pred_region
        %s1707 = ssub.s32 %s23, 2
        // Predicated region
        $region77: #{tpu_custom_call.1} parent=75 // pred_check
          %p1708 = pneg %p309
        $region78: #{tpu_custom_call.1} parent=75 // pred_check_branch
          %1710 = sbr.rel (%p1708) target = $region80
        $region79: #{tpu_custom_call.1} parent=75 // pred_region
          %s1711 = sand.u32 %s294, 1
          %s1712 = scalar_lea.sflag [#allocation4], %s1711
          %s1713 = sand.u32 %s294, 1
          %s1714 = smul.addr %s1713, 2
          %s1715 = scalar_lea.vmem [#allocation3], %s1714
          %1716 = dma.done %s1712, 32
        $region80: #{tpu_custom_call.1} parent=75 // pred_fallthru
          _
      $region76: #{tpu_custom_call.1} parent=5 // pred_fallthru
        _
    $region6: #{tpu_custom_call.1} parent=1 // loop_footer
      %s27 = sadd.s32 1, %s23
    $region7: #{tpu_custom_call.1} parent=1 // loop_footer_branch
      %22 = sbr.rel target = $region3
    $region8: #{tpu_custom_call.1} parent=1 // loop_exit
      _
    %1717 = vsyncpa [#allocation4], 1
    %s1718 = scalar_lea.sflag [#allocation4], 1
    %1719 = vsyncpa %s1718, 1

</llo_original>
